<compile_context>
chip_gen: v7x
topology: tpu7x:2x2x1
jax: 0.10.0
libtpu: 0.0.40
codegen_flags: <defaults>
</compile_context>

<pallas_src>
import jax
import jax.numpy as jnp
import numpy as np
from jax.experimental import pallas as pl
from jax.experimental.pallas import tpu as pltpu

LEAKY_RATE = 0.1
BN_EPS = 1e-5

# f32 keeps parity with the PyTorch module; set to jnp.bfloat16 on v6e/v7x to halve
# HBM traffic of the big gathered tensors (all accumulation / BN math stays f32).
COMPUTE_DTYPE = jnp.float32

# Scoped-VMEM request: above the 16/32 MiB defaults, below v7x's 64 MiB physical.
VMEM_LIMIT_BYTES = 48 * 1024 * 1024

ROW_TILE_TARGET = 512      # rows (points) per tile in the fused cost-volume kernel
STATS_TILE_TARGET = 2048   # rows per tile in the BN-stats reduction kernels


# ----------------------------------------------------------------------------- helpers
def _pick_tile(n, target):
    """Largest divisor of n that is <= target and a multiple of 8 (or n itself)."""
    for t in range(min(n, target), 0, -1):
        if n % t == 0 and (t % 8 == 0 or t == n):
            return t
    return n


def _const_spec(a):
    """Whole-array block with a constant index_map -> stays VMEM-resident across grid."""
    shape = a.shape
    return pl.BlockSpec(shape, lambda *_: (0,) * len(shape))


# ----------------------------------------------------------------------------- kernels
def make_cost_volume_kernel(n_extra_mlp, n_wn, K, split_first, leaky=LEAKY_RATE):
    """Fused cost-volume kernel body.

    Grid = (B, N1 // T, K); k (the neighbour index) is the innermost reduction axis.
    Per step the kernel sees one [T, C] slab of every tensor, runs the feature MLP
    (LeakyReLU 0.1) and the WeightNet (1x1 conv -> BN with precomputed global batch
    stats -> ReLU) and accumulates weights * features into a VMEM f32 accumulator,
    written back once at k == K-1.

    Ref order (split_first=True, stage 1):
      pts1 (1,T,D1), g_pts2 (1,1,T,D2), dir (1,1,T,3),
      w_p1, w_p2, w_dir, b1,                 # first MLP layer, row-split
      n_extra_mlp * (w, b),                  # remaining MLP layers
      n_wn * (w, b, mean, inv_std),          # WeightNet layers
      out (1,T,Cout), base_scratch (T,C1), acc_scratch (T,Cout)
    Ref order (split_first=False, stage 2):
      feat (1,1,T,Cout), dir (1,1,T,3), n_wn * (w, b, mean, inv_std),
      out (1,T,Cout), acc_scratch (T,Cout)
    """
    def kernel(*refs):
        if split_first:
            pts1_ref, pts2_ref, dir_ref = refs[0], refs[1], refs[2]
            w_p1, w_p2, w_dir, b1 = refs[3], refs[4], refs[5], refs[6]
            pos = 7
        else:
            feat_ref, dir_ref = refs[0], refs[1]
            pos = 2
        extra = []
        for _ in range(n_extra_mlp):
            extra.append((refs[pos], refs[pos + 1]))
            pos += 2
        wn = []
        for _ in range(n_wn):
            wn.append((refs[pos], refs[pos + 1], refs[pos + 2], refs[pos + 3]))
            pos += 4
        out_ref = refs[pos]
        pos += 1
        if split_first:
            base_ref = refs[pos]
            pos += 1
        acc_ref = refs[pos]

        k = pl.program_id(2)

        @pl.when(k == 0)
        def _init():
            acc_ref[...] = jnp.zeros_like(acc_ref)
            if split_first:
                # pts1 does not depend on the neighbour index k: compute its
                # contribution to the first MLP layer once per row tile.
                base_ref[...] = (
                    jnp.dot(pts1_ref[0].astype(jnp.float32), w_p1[...],
                            preferred_element_type=jnp.float32) + b1[...])

        # feature path: 1x1 convs == channel matmuls, LeakyReLU(0.1)
        if split_first:
            x = (base_ref[...]
                 + jnp.dot(pts2_ref[0, 0].astype(jnp.float32), w_p2[...],
                           preferred_element_type=jnp.float32)
                 + jnp.dot(dir_ref[0, 0].astype(jnp.float32), w_dir[...],
                           preferred_element_type=jnp.float32))
            x = jnp.maximum(x, leaky * x)
        else:
            x = feat_ref[0, 0].astype(jnp.float32)
        for (w, b) in extra:
            x = jnp.dot(x, w[...], preferred_element_type=jnp.float32) + b[...]
            x = jnp.maximum(x, leaky * x)

        # WeightNet: 1x1 conv -> BatchNorm (precomputed global batch stats) -> ReLU
        # TODO(synk): the 3-wide first conv could be 3 VPU FMAs instead of an MXU dot.
        wgt = dir_ref[0, 0].astype(jnp.float32)
        for (w, b, mu, inv) in wn:
            y = jnp.dot(wgt, w[...], preferred_element_type=jnp.float32) + b[...]
            wgt = jnp.maximum((y - mu[...]) * inv[...], 0.0)

        acc_ref[...] += x * wgt

        @pl.when(k == K - 1)
        def _store():
            # TODO(synk): Cout < 128 lanes -> masked stores; a lane-dense repack
            # ([T,Cout]->[T//8,8*Cout]) of the output slab would densify writeback.
            out_ref[0] = acc_ref[...].astype(out_ref.dtype)

    return kernel


def make_wn_stats_kernel(layer_idx):
    """Accumulate sum / sum-of-squares of WeightNet layer `layer_idx` pre-activations
    over all rows (row-tiled grid, output blocks revisited across the grid)."""
    def kernel(*refs):
        dir_ref = refs[0]
        pos = 1
        convs = []
        for _ in range(layer_idx + 1):
            convs.append((refs[pos], refs[pos + 1]))
            pos += 2
        stats = []
        for _ in range(layer_idx):
            stats.append((refs[pos], refs[pos + 1]))
            pos += 2
        sum_ref, ssq_ref = refs[pos], refs[pos + 1]

        x = dir_ref[...].astype(jnp.float32)
        for j in range(layer_idx):
            w, b = convs[j]
            mu, inv = stats[j]
            y = jnp.dot(x, w[...], preferred_element_type=jnp.float32) + b[...]
            x = jnp.maximum((y - mu[...]) * inv[...], 0.0)
        w, b = convs[layer_idx]
        y = jnp.dot(x, w[...], preferred_element_type=jnp.float32) + b[...]

        @pl.when(pl.program_id(0) == 0)
        def _init():
            sum_ref[...] = jnp.zeros_like(sum_ref)
            ssq_ref[...] = jnp.zeros_like(ssq_ref)

        sum_ref[...] += jnp.sum(y, axis=0, keepdims=True)
        ssq_ref[...] += jnp.sum(y * y, axis=0, keepdims=True)

    return kernel


# ----------------------------------------------------------------------------- wrappers
def _run_wn_layer_stats(dir_flat, wn_params, prior_stats, layer_idx, tile):
    m = dir_flat.shape[0]
    cout = wn_params[layer_idx][0].shape[1]
    inputs = [dir_flat]
    in_specs = [pl.BlockSpec((tile, dir_flat.shape[1]), lambda i: (i, 0))]
    for j in range(layer_idx + 1):
        w, b = wn_params[j]
        inputs += [w, b]
        in_specs += [_const_spec(w), _const_spec(b)]
    for j in range(layer_idx):
        mu, inv = prior_stats[j]
        inputs += [mu, inv]
        in_specs += [_const_spec(mu), _const_spec(inv)]
    return pl.pallas_call(
        make_wn_stats_kernel(layer_idx),
        grid=(m // tile,),
        in_specs=in_specs,
        out_specs=(pl.BlockSpec((1, cout), lambda i: (0, 0)),
                   pl.BlockSpec((1, cout), lambda i: (0, 0))),
        out_shape=(jax.ShapeDtypeStruct((1, cout), jnp.float32),
                   jax.ShapeDtypeStruct((1, cout), jnp.float32)),
        compiler_params=pltpu.CompilerParams(
            dimension_semantics=("arbitrary",),
            vmem_limit_bytes=VMEM_LIMIT_BYTES),
    )(*inputs)


def compute_wn_batch_stats(direction, wn_params):
    """direction [B,K,N1,3] -> per-layer (mean [1,C], inv_std [1,C]); PyTorch
    training-mode BatchNorm2d stats over all B*K*N1 positions (gamma=1, beta=0)."""
    B, K, N1, c = direction.shape
    m = B * K * N1
    dir_flat = direction.reshape(m, c)
    tile = _pick_tile(m, STATS_TILE_TARGET)
    stats = []
    for layer in range(len(wn_params)):
        s, ss = _run_wn_layer_stats(dir_flat, wn_params, stats, layer, tile)
        mean = s / m
        var = jnp.maximum(ss / m - mean * mean, 0.0)
        stats.append((mean, jax.lax.rsqrt(var + BN_EPS)))
    return stats


def run_point_to_patch(pts1, g_pts2, direction, mlp_params, wn_params, wn_stats, row_tile):
    """Stage 1: pts1 [B,N1,D1], g_pts2 [B,K,N1,D2], direction [B,K,N1,3] -> [B,N1,Cout]."""
    B, N1, D1 = pts1.shape
    _, K, _, D2 = g_pts2.shape
    T = row_tile
    w1, b1 = mlp_params[0]
    w_p1, w_p2, w_dir = w1[:D1], w1[D1:D1 + D2], w1[D1 + D2:]
    extra = mlp_params[1:]
    c1 = w1.shape[1]
    cout = mlp_params[-1][0].shape[1]

    inputs = [pts1, g_pts2, direction, w_p1, w_p2, w_dir, b1]
    in_specs = [
        pl.BlockSpec((1, T, D1), lambda b, i, k: (b, i, 0)),        # reused across k
        pl.BlockSpec((1, 1, T, D2), lambda b, i, k: (b, k, i, 0)),  # k-th neighbour slab
        pl.BlockSpec((1, 1, T, 3), lambda b, i, k: (b, k, i, 0)),
        _const_spec(w_p1), _const_spec(w_p2), _const_spec(w_dir), _const_spec(b1),
    ]
    for (w, b) in extra:
        inputs += [w, b]
        in_specs += [_const_spec(w), _const_spec(b)]
    for (w, b), (mu, inv) in zip(wn_params, wn_stats):
        inputs += [w, b, mu, inv]
        in_specs += [_const_spec(w), _const_spec(b), _const_spec(mu), _const_spec(inv)]

    kernel = make_cost_volume_kernel(len(extra), len(wn_params), K, split_first=True)
    return pl.pallas_call(
        kernel,
        grid=(B, N1 // T, K),
        in_specs=in_specs,
        out_specs=pl.BlockSpec((1, T, cout), lambda b, i, k: (b, i, 0)),
        out_shape=jax.ShapeDtypeStruct((B, N1, cout), jnp.float32),
        scratch_shapes=[pltpu.VMEM((T, c1), jnp.float32),
                        pltpu.VMEM((T, cout), jnp.float32)],
        compiler_params=pltpu.CompilerParams(
            dimension_semantics=("parallel", "parallel", "arbitrary"),
            vmem_limit_bytes=VMEM_LIMIT_BYTES),
    )(*inputs)


def run_patch_to_patch(feat, direction, wn_params, wn_stats, row_tile):
    """Stage 2: feat [B,K,N1,C], direction [B,K,N1,3] -> [B,N1,C]."""
    B, K, N1, C = feat.shape
    T = row_tile
    inputs = [feat, direction]
    in_specs = [
        pl.BlockSpec((1, 1, T, C), lambda b, i, k: (b, k, i, 0)),
        pl.BlockSpec((1, 1, T, 3), lambda b, i, k: (b, k, i, 0)),
    ]
    for (w, b), (mu, inv) in zip(wn_params, wn_stats):
        inputs += [w, b, mu, inv]
        in_specs += [_const_spec(w), _const_spec(b), _const_spec(mu), _const_spec(inv)]

    kernel = make_cost_volume_kernel(0, len(wn_params), K, split_first=False)
    return pl.pallas_call(
        kernel,
        grid=(B, N1 // T, K),
        in_specs=in_specs,
        out_specs=pl.BlockSpec((1, T, C), lambda b, i, k: (b, i, 0)),
        out_shape=jax.ShapeDtypeStruct((B, N1, C), jnp.float32),
        scratch_shapes=[pltpu.VMEM((T, C), jnp.float32)],
        compiler_params=pltpu.CompilerParams(
            dimension_semantics=("parallel", "parallel", "arbitrary"),
            vmem_limit_bytes=VMEM_LIMIT_BYTES),
    )(*inputs)


# ----------------------------------------------------------------------------- JAX glue
def knn_indices(k, query, ref):
    """query [B,Nq,3], ref [B,Nr,3] -> [B,Nq,k] indices of k nearest ref points."""
    # TODO(synk): pointutils.knn tie-breaking order may differ; top_k on squared dists.
    d = (jnp.sum(query * query, axis=-1, keepdims=True)
         - 2.0 * jnp.einsum('bqc,brc->bqr', query, ref)
         + jnp.sum(ref * ref, axis=-1)[:, None, :])
    _, idx = jax.lax.top_k(-d, k)
    return idx


def group_points(points, idx):
    """points [B,N,C], idx [B,N1,K] -> [B,N1,K,C]  (reference layout)."""
    return jax.vmap(lambda p, i: p[i])(points, idx)


def group_points_kmajor(points, idx):
    """points [B,N,C], idx [B,N1,K] -> [B,K,N1,C]  (K-major, no big-tensor transpose)."""
    idx_t = jnp.transpose(idx, (0, 2, 1))            # tiny int transpose only
    return jax.vmap(lambda p, i: p[i])(points, idx_t)


class PointConvFlowPallas:
    """JAX/Pallas port of PointConvFlow (bn=False, use_leaky=True)."""

    def __init__(self, nsample, in_channel, mlp, key):
        self.nsample = nsample
        keys = iter(jax.random.split(key, 64))
        last = in_channel * 2 + 3
        self.mlp_params = []
        for out in mlp:
            self.mlp_params.append(self._init_conv(next(keys), last, out))
            last = out
        self.out_channel = last
        hidden = [8, 8]

        def make_weightnet(cin, cout):
            params, c = [], cin
            for h in hidden:
                params.append(self._init_conv(next(keys), c, h))
                c = h
            params.append(self._init_conv(next(keys), c, cout))
            return params

        self.wn1 = make_weightnet(3, last)
        self.wn2 = make_weightnet(3, last)

    @staticmethod
    def _init_conv(key, cin, cout):
        # deterministic synthetic init; weight stored pre-transposed [cin, cout]
        kw, kb = jax.random.split(key)
        w = jax.random.normal(kw, (cin, cout), jnp.float32) * 0.1
        b = jax.random.normal(kb, (1, cout), jnp.float32) * 0.1
        return (w, b)

    def __call__(self, xyz1, xyz2, points1, points2):
        B, _, N1 = xyz1.shape
        K = self.nsample
        xyz1_t = jnp.transpose(xyz1, (0, 2, 1))      # [B, N1, 3]
        xyz2_t = jnp.transpose(xyz2, (0, 2, 1))      # [B, N2, 3]
        pts1_t = jnp.transpose(points1, (0, 2, 1))   # [B, N1, D1]
        pts2_t = jnp.transpose(points2, (0, 2, 1))   # [B, N2, D2]

        T = _pick_tile(N1, ROW_TILE_TARGET)

        # ---- stage 1: point-to-patch cost (xyz1 -> xyz2 neighbourhood)
        idx12 = knn_indices(K, xyz1_t, xyz2_t)                     # [B, N1, K]
        nbr2 = group_points_kmajor(xyz2_t, idx12)                  # [B, K, N1, 3]
        dir12 = nbr2 - xyz1_t[:, None, :, :]                       # [B, K, N1, 3]
        g_pts2 = group_points_kmajor(pts2_t, idx12)                # [B, K, N1, D2]

        dir12_c = dir12.astype(COMPUTE_DTYPE)
        wn1_stats = compute_wn_batch_stats(dir12_c, self.wn1)
        p2p = run_point_to_patch(pts1_t.astype(COMPUTE_DTYPE),
                                 g_pts2.astype(COMPUTE_DTYPE),
                                 dir12_c, self.mlp_params, self.wn1, wn1_stats, T)
        # p2p: [B, N1, Cout] (f32)

        # ---- stage 2: patch-to-patch cost (xyz1 self neighbourhood)
        idx11 = knn_indices(K, xyz1_t, xyz1_t)
        nbr1 = group_points_kmajor(xyz1_t, idx11)
        dir11 = nbr1 - xyz1_t[:, None, :, :]                       # [B, K, N1, 3]
        g_cost = group_points_kmajor(p2p, idx11)                   # [B, K, N1, Cout]

        dir11_c = dir11.astype(COMPUTE_DTYPE)
        wn2_stats = compute_wn_batch_stats(dir11_c, self.wn2)
        out = run_patch_to_patch(g_cost.astype(COMPUTE_DTYPE), dir11_c,
                                 self.wn2, wn2_stats, T)           # [B, N1, Cout]
        return jnp.transpose(out, (0, 2, 1))                       # [B, Cout, N1]


# ----------------------------------------------------------------------------- pure-JAX reference
def reference_forward(model, xyz1, xyz2, points1, points2):
    B, _, N1 = xyz1.shape
    K = model.nsample
    xyz1_t = jnp.transpose(xyz1, (0, 2, 1))
    xyz2_t = jnp.transpose(xyz2, (0, 2, 1))
    pts1_t = jnp.transpose(points1, (0, 2, 1))
    pts2_t = jnp.transpose(points2, (0, 2, 1))

    def mlp_apply(x, params):
        for w, b in params:
            x = x @ w + b
            x = jnp.maximum(x, LEAKY_RATE * x)
        return x

    def wn_apply(x, params):
        for w, b in params:
            x = x @ w + b
            mu = jnp.mean(x, axis=(0, 1, 2), keepdims=True)
            var = jnp.mean(jnp.square(x - mu), axis=(0, 1, 2), keepdims=True)
            x = (x - mu) * jax.lax.rsqrt(var + BN_EPS)
            x = jnp.maximum(x, 0.0)
        return x

    idx12 = knn_indices(K, xyz1_t, xyz2_t)
    nbr_xyz = group_points(xyz2_t, idx12)
    dir_xyz = nbr_xyz - xyz1_t[:, :, None, :]
    g_pts2 = group_points(pts2_t, idx12)
    g_pts1 = jnp.broadcast_to(pts1_t[:, :, None, :], (B, N1, K, pts1_t.shape[-1]))
    new_points = jnp.concatenate([g_pts1, g_pts2, dir_xyz], axis=-1)

    h = mlp_apply(new_points, model.mlp_params)
    w1 = wn_apply(dir_xyz, model.wn1)
    p2p = jnp.sum(h * w1, axis=2)                          # [B, N1, Cout]

    idx11 = knn_indices(K, xyz1_t, xyz1_t)
    nbr_xyz1 = group_points(xyz1_t, idx11)
    dir_xyz1 = nbr_xyz1 - xyz1_t[:, :, None, :]
    w2 = wn_apply(dir_xyz1, model.wn2)
    g_cost = group_points(p2p, idx11)
    out = jnp.sum(w2 * g_cost, axis=2)                     # [B, N1, Cout]
    return jnp.transpose(out, (0, 2, 1))


# ----------------------------------------------------------------------------- main
if __name__ == "__main__":
    key = jax.random.PRNGKey(0)
    B, N1, N2, D, K = 2, 64, 64, 16, 8
    mlp = [16, 16]

    k1, k2, k3, k4, k5 = jax.random.split(key, 5)
    xyz1 = jax.random.normal(k1, (B, 3, N1), jnp.float32)
    xyz2 = jax.random.normal(k2, (B, 3, N2), jnp.float32)
    points1 = jax.random.normal(k3, (B, D, N1), jnp.float32)
    points2 = jax.random.normal(k4, (B, D, N2), jnp.float32)

    model = PointConvFlowPallas(nsample=K, in_channel=D, mlp=mlp, key=k5)

    out = jax.block_until_ready(model(xyz1, xyz2, points1, points2))
    ref = jax.block_until_ready(reference_forward(model, xyz1, xyz2, points1, points2))

    assert out.shape == (B, mlp[-1], N1), out.shape
    np.testing.assert_allclose(np.asarray(out), np.asarray(ref), rtol=3e-4, atol=3e-4)
    print("KERNEL_OK")
</pallas_src>

<mosaic_0001>
module attributes {stable_mosaic.version = 11 : i64} {
  func.func @kernel(%arg0: i32, %arg1: memref<1024x3xf32, #tpu.memory_space<vmem>>, %arg2: memref<3x8xf32, #tpu.memory_space<vmem>>, %arg3: memref<1x8xf32, #tpu.memory_space<vmem>>, %arg4: memref<1x8xf32, #tpu.memory_space<vmem>>, %arg5: memref<1x8xf32, #tpu.memory_space<vmem>>) attributes {dimension_semantics = [#tpu.dimension_semantics<arbitrary>], iteration_bounds = array<i64: 1>, scalar_prefetch = 0 : i64, scratch_operands = 0 : i64, tpu.core_type = #tpu.core_type<tc>, window_params = [{transform_indices = @transform_0, window_bounds = array<i64: 1024, 3>}, {pipeline_mode = #tpu.pipeline_mode<synchronous>, transform_indices = @transform_1, window_bounds = array<i64: 3, 8>}, {pipeline_mode = #tpu.pipeline_mode<synchronous>, transform_indices = @transform_2, window_bounds = array<i64: 1, 8>}, {pipeline_mode = #tpu.pipeline_mode<synchronous>, transform_indices = @transform_3, window_bounds = array<i64: 1, 8>}, {pipeline_mode = #tpu.pipeline_mode<synchronous>, transform_indices = @transform_4, window_bounds = array<i64: 1, 8>}]} {
    %c0 = arith.constant 0 : index
    %c0_0 = arith.constant 0 : index
    %0 = vector.load %arg1[%c0, %c0_0] : memref<1024x3xf32, #tpu.memory_space<vmem>>, vector<1024x3xf32>
    %c0_1 = arith.constant 0 : index
    %c0_2 = arith.constant 0 : index
    %1 = vector.load %arg2[%c0_1, %c0_2] : memref<3x8xf32, #tpu.memory_space<vmem>>, vector<3x8xf32>
    %cst = arith.constant dense<0.000000e+00> : vector<1024x8xf32>
    %2 = tpu.matmul %0, %1, %cst {dimension_numbers = #tpu.dot_dimension_numbers<[1], [0], [0], [1], [0, 0, 1, 1], [], []>} : vector<1024x3xf32>, vector<3x8xf32>, vector<1024x8xf32> -> vector<1024x8xf32>
    %c0_3 = arith.constant 0 : index
    %c0_4 = arith.constant 0 : index
    %3 = vector.load %arg3[%c0_3, %c0_4] : memref<1x8xf32, #tpu.memory_space<vmem>>, vector<1x8xf32>
    %4 = vector.broadcast %3 : vector<1x8xf32> to vector<1024x8xf32>
    %5 = arith.addf %2, %4 : vector<1024x8xf32>
    %c0_i32 = arith.constant 0 : i32
    %6 = arith.cmpi eq, %arg0, %c0_i32 : i32
    %7 = arith.extui %6 : i1 to i32
    %c0_i32_5 = arith.constant 0 : i32
    %8 = arith.cmpi ne, %7, %c0_i32_5 : i32
    scf.if %8 {
      %cst_16 = arith.constant 0.000000e+00 : f32
      %20 = vector.broadcast %cst_16 : f32 to vector<1x8xf32>
      %c0_17 = arith.constant 0 : index
      %c0_18 = arith.constant 0 : index
      %21 = vector.load %arg4[%c0_17, %c0_18] : memref<1x8xf32, #tpu.memory_space<vmem>>, vector<1x8xf32>
      tpu.vector_store %arg4[%c0_17, %c0_18], %20 {strides = array<i32>} : memref<1x8xf32, #tpu.memory_space<vmem>>, vector<1x8xf32>,
      %cst_19 = arith.constant 0.000000e+00 : f32
      %22 = vector.broadcast %cst_19 : f32 to vector<1x8xf32>
      %c0_20 = arith.constant 0 : index
      %c0_21 = arith.constant 0 : index
      %23 = vector.load %arg5[%c0_20, %c0_21] : memref<1x8xf32, #tpu.memory_space<vmem>>, vector<1x8xf32>
      tpu.vector_store %arg5[%c0_20, %c0_21], %22 {strides = array<i32>} : memref<1x8xf32, #tpu.memory_space<vmem>>, vector<1x8xf32>,
    } else {
    }
    %c0_6 = arith.constant 0 : index
    %c0_7 = arith.constant 0 : index
    %9 = vector.load %arg4[%c0_6, %c0_7] : memref<1x8xf32, #tpu.memory_space<vmem>>, vector<1x8xf32>
    %cst_8 = arith.constant dense<0.000000e+00> : vector<8xf32>
    %10 = vector.multi_reduction <add>, %5, %cst_8 [0] : vector<1024x8xf32> to vector<8xf32>
    %11 = vector.shape_cast %10 : vector<8xf32> to vector<1x8xf32>
    %12 = arith.addf %9, %11 : vector<1x8xf32>
    %c0_9 = arith.constant 0 : index
    %c0_10 = arith.constant 0 : index
    %13 = vector.load %arg4[%c0_9, %c0_10] : memref<1x8xf32, #tpu.memory_space<vmem>>, vector<1x8xf32>
    tpu.vector_store %arg4[%c0_9, %c0_10], %12 {strides = array<i32>} : memref<1x8xf32, #tpu.memory_space<vmem>>, vector<1x8xf32>,
    %c0_11 = arith.constant 0 : index
    %c0_12 = arith.constant 0 : index
    %14 = vector.load %arg5[%c0_11, %c0_12] : memref<1x8xf32, #tpu.memory_space<vmem>>, vector<1x8xf32>
    %15 = arith.mulf %5, %5 : vector<1024x8xf32>
    %cst_13 = arith.constant dense<0.000000e+00> : vector<8xf32>
    %16 = vector.multi_reduction <add>, %15, %cst_13 [0] : vector<1024x8xf32> to vector<8xf32>
    %17 = vector.shape_cast %16 : vector<8xf32> to vector<1x8xf32>
    %18 = arith.addf %14, %17 : vector<1x8xf32>
    %c0_14 = arith.constant 0 : index
    %c0_15 = arith.constant 0 : index
    %19 = vector.load %arg5[%c0_14, %c0_15] : memref<1x8xf32, #tpu.memory_space<vmem>>, vector<1x8xf32>
    tpu.vector_store %arg5[%c0_14, %c0_15], %18 {strides = array<i32>} : memref<1x8xf32, #tpu.memory_space<vmem>>, vector<1x8xf32>,
    return
  }
  func.func @transform_0(%arg0: i32) -> (i32, i32) {
    %c0_i32 = arith.constant 0 : i32
    %c0_i32_0 = arith.constant 0 : i32
    return %arg0, %c0_i32 : i32, i32
  }
  func.func @transform_1(%arg0: i32) -> (i32, i32) {
    %c0_i32 = arith.constant 0 : i32
    %c0_i32_0 = arith.constant 0 : i32
    %c0_i32_1 = arith.constant 0 : i32
    return %c0_i32, %c0_i32_0 : i32, i32
  }
  func.func @transform_2(%arg0: i32) -> (i32, i32) {
    %c0_i32 = arith.constant 0 : i32
    %c0_i32_0 = arith.constant 0 : i32
    %c0_i32_1 = arith.constant 0 : i32
    return %c0_i32, %c0_i32_0 : i32, i32
  }
  func.func @transform_3(%arg0: i32) -> (i32, i32) {
    %c0_i32 = arith.constant 0 : i32
    %c0_i32_0 = arith.constant 0 : i32
    %c0_i32_1 = arith.constant 0 : i32
    return %c0_i32, %c0_i32_0 : i32, i32
  }
  func.func @transform_4(%arg0: i32) -> (i32, i32) {
    %c0_i32 = arith.constant 0 : i32
    %c0_i32_0 = arith.constant 0 : i32
    %c0_i32_1 = arith.constant 0 : i32
    return %c0_i32, %c0_i32_0 : i32, i32
  }
}

</mosaic_0001>

<llo_original>
// kernel: tpu_custom_call.1
$region0: #{tpu_custom_call.1}
  #allocation0 [shape = 'u32[]', space=smem, size = 0x4, offset = 0x4, fixed_abs, tag = 'smem constant byte address 0x4 - core index']
  #allocation1 [shape = 'u32[144,128]{1,0:T(1,128)}', space=vmem, size = 0x12000, scoped, tag = 'internal scratch']
  %s0 = inlined_call_operand.vmem [shape: f32[1024,3], index: 0, kind: input, shape index: {}]
  %s1 = inlined_call_operand.vmem [shape: f32[3,8], index: 1, kind: input, shape index: {}]
  %s2 = inlined_call_operand.vmem [shape: f32[1,8], index: 2, kind: input, shape index: {}]
  %s3 = inlined_call_operand.hbm [shape: f32[1,8], index: 3, kind: output, shape index: {0}]
  %s4 = inlined_call_operand.hbm [shape: f32[1,8], index: 4, kind: output, shape index: {1}]
  %5 = xla_tuple %s3, %s4
  %s6 = sld [smem:[#allocation0]]
  $region34: #{tpu_custom_call.1} parent=0
    _
  %s8 = ssub.s32 1, %s6
  %s9 = scalar_select 0, %s8, %s6
  $region1: #{tpu_custom_call.1} parent=0
    #allocation2 [shape = 'u8[512]{0}', space=vmem, size = 0x400, scoped, tag = 'output window, operand 0, single buffered']
    #allocation3 [shape = 's32[1]{0}', space=sflag, size = 0x4, scoped, tag = 'scoped memory for tpu_custom_call.1']
    #allocation4 [shape = 'u8[512]{0}', space=vmem, size = 0x400, scoped, tag = 'output window, operand 1, single buffered']
    #allocation5 [shape = 's32[1]{0}', space=sflag, size = 0x4, scoped, tag = 'scoped memory for tpu_custom_call.1']
    %10 = vsyncpa [#allocation3], 0
    %11 = vsyncpa [#allocation5], 0
    // Predicated region
    $region2: #{tpu_custom_call.1} parent=1 // pred_check
      _
    $region3: #{tpu_custom_call.1} parent=1 // pred_check_branch
      %13 = sbr.rel (0) target = $region5
    $region4: #{tpu_custom_call.1} parent=1 // pred_region
      _
    $region5: #{tpu_custom_call.1} parent=1 // pred_fallthru
      _
    // Predicated region
    $region6: #{tpu_custom_call.1} parent=1 // pred_check
      _
    $region7: #{tpu_custom_call.1} parent=1 // pred_check_branch
      %15 = sbr.rel (0) target = $region9
    $region8: #{tpu_custom_call.1} parent=1 // pred_region
      _
    $region9: #{tpu_custom_call.1} parent=1 // pred_fallthru
      _
    // Predicated region
    $region10: #{tpu_custom_call.1} parent=1 // pred_check
      _
    $region11: #{tpu_custom_call.1} parent=1 // pred_check_branch
      %17 = sbr.rel (0) target = $region13
    $region12: #{tpu_custom_call.1} parent=1 // pred_region
      _
    $region13: #{tpu_custom_call.1} parent=1 // pred_fallthru
      _
    %v18 = vld [vmem:[%s0] sm:$0xff]
    %v19 = vld [vmem:[%s0 + $0x8] sm:$0xff]
    %v20 = vld [vmem:[%s0 + $0x10] sm:$0xff]
    %v21 = vld [vmem:[%s0 + $0x18] sm:$0xff]
    %v22 = vld [vmem:[%s0 + $0x20] sm:$0xff]
    %v23 = vld [vmem:[%s0 + $0x28] sm:$0xff]
    %v24 = vld [vmem:[%s0 + $0x30] sm:$0xff]
    %v25 = vld [vmem:[%s0 + $0x38] sm:$0xff]
    %v26 = vld [vmem:[%s0 + $0x40] sm:$0xff]
    %v27 = vld [vmem:[%s0 + $0x48] sm:$0xff]
    %v28 = vld [vmem:[%s0 + $0x50] sm:$0xff]
    %v29 = vld [vmem:[%s0 + $0x58] sm:$0xff]
    %v30 = vld [vmem:[%s0 + $0x60] sm:$0xff]
    %v31 = vld [vmem:[%s0 + $0x68] sm:$0xff]
    %v32 = vld [vmem:[%s0 + $0x70] sm:$0xff]
    %v33 = vld [vmem:[%s0 + $0x78] sm:$0xff]
    %v34 = vld [vmem:[%s0 + $0x80] sm:$0xff]
    %v35 = vld [vmem:[%s0 + $0x88] sm:$0xff]
    %v36 = vld [vmem:[%s0 + $0x90] sm:$0xff]
    %v37 = vld [vmem:[%s0 + $0x98] sm:$0xff]
    %v38 = vld [vmem:[%s0 + $0xa0] sm:$0xff]
    %v39 = vld [vmem:[%s0 + $0xa8] sm:$0xff]
    %v40 = vld [vmem:[%s0 + $0xb0] sm:$0xff]
    %v41 = vld [vmem:[%s0 + $0xb8] sm:$0xff]
    %v42 = vld [vmem:[%s0 + $0xc0] sm:$0xff]
    %v43 = vld [vmem:[%s0 + $0xc8] sm:$0xff]
    %v44 = vld [vmem:[%s0 + $0xd0] sm:$0xff]
    %v45 = vld [vmem:[%s0 + $0xd8] sm:$0xff]
    %v46 = vld [vmem:[%s0 + $0xe0] sm:$0xff]
    %v47 = vld [vmem:[%s0 + $0xe8] sm:$0xff]
    %v48 = vld [vmem:[%s0 + $0xf0] sm:$0xff]
    %v49 = vld [vmem:[%s0 + $0xf8] sm:$0xff]
    %v50 = vld [vmem:[%s0 + $0x100] sm:$0xff]
    %v51 = vld [vmem:[%s0 + $0x108] sm:$0xff]
    %v52 = vld [vmem:[%s0 + $0x110] sm:$0xff]
    %v53 = vld [vmem:[%s0 + $0x118] sm:$0xff]
    %v54 = vld [vmem:[%s0 + $0x120] sm:$0xff]
    %v55 = vld [vmem:[%s0 + $0x128] sm:$0xff]
    %v56 = vld [vmem:[%s0 + $0x130] sm:$0xff]
    %v57 = vld [vmem:[%s0 + $0x138] sm:$0xff]
    %v58 = vld [vmem:[%s0 + $0x140] sm:$0xff]
    %v59 = vld [vmem:[%s0 + $0x148] sm:$0xff]
    %v60 = vld [vmem:[%s0 + $0x150] sm:$0xff]
    %v61 = vld [vmem:[%s0 + $0x158] sm:$0xff]
    %v62 = vld [vmem:[%s0 + $0x160] sm:$0xff]
    %v63 = vld [vmem:[%s0 + $0x168] sm:$0xff]
    %v64 = vld [vmem:[%s0 + $0x170] sm:$0xff]
    %v65 = vld [vmem:[%s0 + $0x178] sm:$0xff]
    %v66 = vld [vmem:[%s0 + $0x180] sm:$0xff]
    %v67 = vld [vmem:[%s0 + $0x188] sm:$0xff]
    %v68 = vld [vmem:[%s0 + $0x190] sm:$0xff]
    %v69 = vld [vmem:[%s0 + $0x198] sm:$0xff]
    %v70 = vld [vmem:[%s0 + $0x1a0] sm:$0xff]
    %v71 = vld [vmem:[%s0 + $0x1a8] sm:$0xff]
    %v72 = vld [vmem:[%s0 + $0x1b0] sm:$0xff]
    %v73 = vld [vmem:[%s0 + $0x1b8] sm:$0xff]
    %v74 = vld [vmem:[%s0 + $0x1c0] sm:$0xff]
    %v75 = vld [vmem:[%s0 + $0x1c8] sm:$0xff]
    %v76 = vld [vmem:[%s0 + $0x1d0] sm:$0xff]
    %v77 = vld [vmem:[%s0 + $0x1d8] sm:$0xff]
    %v78 = vld [vmem:[%s0 + $0x1e0] sm:$0xff]
    %v79 = vld [vmem:[%s0 + $0x1e8] sm:$0xff]
    %v80 = vld [vmem:[%s0 + $0x1f0] sm:$0xff]
    %v81 = vld [vmem:[%s0 + $0x1f8] sm:$0xff]
    %v82 = vld [vmem:[%s0 + $0x200] sm:$0xff]
    %v83 = vld [vmem:[%s0 + $0x208] sm:$0xff]
    %v84 = vld [vmem:[%s0 + $0x210] sm:$0xff]
    %v85 = vld [vmem:[%s0 + $0x218] sm:$0xff]
    %v86 = vld [vmem:[%s0 + $0x220] sm:$0xff]
    %v87 = vld [vmem:[%s0 + $0x228] sm:$0xff]
    %v88 = vld [vmem:[%s0 + $0x230] sm:$0xff]
    %v89 = vld [vmem:[%s0 + $0x238] sm:$0xff]
    %v90 = vld [vmem:[%s0 + $0x240] sm:$0xff]
    %v91 = vld [vmem:[%s0 + $0x248] sm:$0xff]
    %v92 = vld [vmem:[%s0 + $0x250] sm:$0xff]
    %v93 = vld [vmem:[%s0 + $0x258] sm:$0xff]
    %v94 = vld [vmem:[%s0 + $0x260] sm:$0xff]
    %v95 = vld [vmem:[%s0 + $0x268] sm:$0xff]
    %v96 = vld [vmem:[%s0 + $0x270] sm:$0xff]
    %v97 = vld [vmem:[%s0 + $0x278] sm:$0xff]
    %v98 = vld [vmem:[%s0 + $0x280] sm:$0xff]
    %v99 = vld [vmem:[%s0 + $0x288] sm:$0xff]
    %v100 = vld [vmem:[%s0 + $0x290] sm:$0xff]
    %v101 = vld [vmem:[%s0 + $0x298] sm:$0xff]
    %v102 = vld [vmem:[%s0 + $0x2a0] sm:$0xff]
    %v103 = vld [vmem:[%s0 + $0x2a8] sm:$0xff]
    %v104 = vld [vmem:[%s0 + $0x2b0] sm:$0xff]
    %v105 = vld [vmem:[%s0 + $0x2b8] sm:$0xff]
    %v106 = vld [vmem:[%s0 + $0x2c0] sm:$0xff]
    %v107 = vld [vmem:[%s0 + $0x2c8] sm:$0xff]
    %v108 = vld [vmem:[%s0 + $0x2d0] sm:$0xff]
    %v109 = vld [vmem:[%s0 + $0x2d8] sm:$0xff]
    %v110 = vld [vmem:[%s0 + $0x2e0] sm:$0xff]
    %v111 = vld [vmem:[%s0 + $0x2e8] sm:$0xff]
    %v112 = vld [vmem:[%s0 + $0x2f0] sm:$0xff]
    %v113 = vld [vmem:[%s0 + $0x2f8] sm:$0xff]
    %v114 = vld [vmem:[%s0 + $0x300] sm:$0xff]
    %v115 = vld [vmem:[%s0 + $0x308] sm:$0xff]
    %v116 = vld [vmem:[%s0 + $0x310] sm:$0xff]
    %v117 = vld [vmem:[%s0 + $0x318] sm:$0xff]
    %v118 = vld [vmem:[%s0 + $0x320] sm:$0xff]
    %v119 = vld [vmem:[%s0 + $0x328] sm:$0xff]
    %v120 = vld [vmem:[%s0 + $0x330] sm:$0xff]
    %v121 = vld [vmem:[%s0 + $0x338] sm:$0xff]
    %v122 = vld [vmem:[%s0 + $0x340] sm:$0xff]
    %v123 = vld [vmem:[%s0 + $0x348] sm:$0xff]
    %v124 = vld [vmem:[%s0 + $0x350] sm:$0xff]
    %v125 = vld [vmem:[%s0 + $0x358] sm:$0xff]
    %v126 = vld [vmem:[%s0 + $0x360] sm:$0xff]
    %v127 = vld [vmem:[%s0 + $0x368] sm:$0xff]
    %v128 = vld [vmem:[%s0 + $0x370] sm:$0xff]
    %v129 = vld [vmem:[%s0 + $0x378] sm:$0xff]
    %v130 = vld [vmem:[%s0 + $0x380] sm:$0xff]
    %v131 = vld [vmem:[%s0 + $0x388] sm:$0xff]
    %v132 = vld [vmem:[%s0 + $0x390] sm:$0xff]
    %v133 = vld [vmem:[%s0 + $0x398] sm:$0xff]
    %v134 = vld [vmem:[%s0 + $0x3a0] sm:$0xff]
    %v135 = vld [vmem:[%s0 + $0x3a8] sm:$0xff]
    %v136 = vld [vmem:[%s0 + $0x3b0] sm:$0xff]
    %v137 = vld [vmem:[%s0 + $0x3b8] sm:$0xff]
    %v138 = vld [vmem:[%s0 + $0x3c0] sm:$0xff]
    %v139 = vld [vmem:[%s0 + $0x3c8] sm:$0xff]
    %v140 = vld [vmem:[%s0 + $0x3d0] sm:$0xff]
    %v141 = vld [vmem:[%s0 + $0x3d8] sm:$0xff]
    %v142 = vld [vmem:[%s0 + $0x3e0] sm:$0xff]
    %v143 = vld [vmem:[%s0 + $0x3e8] sm:$0xff]
    %v144 = vld [vmem:[%s0 + $0x3f0] sm:$0xff]
    %v145 = vld [vmem:[%s0 + $0x3f8] sm:$0xff]
    %v146 = vld [vmem:[%s1] sm:$0x7]
    %v147 = vld [vmem:[%s2] sm:$0x1]
    %v149 = vlaneseq
    %v150 = vshrl.u32 %v149, 7
    %v151 = vsub.s32 0, %v150
    %v152 = vrot.slane %v147, %v151
    %vm154 = vcmask 23552
    %v156 = vsel %vm154, %v18, 0
    %v159 = vsel %vm154, %v19, 0
    %v162 = vsel %vm154, %v20, 0
    %v165 = vsel %vm154, %v21, 0
    %v168 = vsel %vm154, %v22, 0
    %v171 = vsel %vm154, %v23, 0
    %v174 = vsel %vm154, %v24, 0
    %v177 = vsel %vm154, %v25, 0
    %v180 = vsel %vm154, %v26, 0
    %v183 = vsel %vm154, %v27, 0
    %v186 = vsel %vm154, %v28, 0
    %v189 = vsel %vm154, %v29, 0
    %v192 = vsel %vm154, %v30, 0
    %v195 = vsel %vm154, %v31, 0
    %v198 = vsel %vm154, %v32, 0
    %v201 = vsel %vm154, %v33, 0
    %v204 = vsel %vm154, %v34, 0
    %v207 = vsel %vm154, %v35, 0
    %v210 = vsel %vm154, %v36, 0
    %v213 = vsel %vm154, %v37, 0
    %v216 = vsel %vm154, %v38, 0
    %v219 = vsel %vm154, %v39, 0
    %v222 = vsel %vm154, %v40, 0
    %v225 = vsel %vm154, %v41, 0
    %v228 = vsel %vm154, %v42, 0
    %v231 = vsel %vm154, %v43, 0
    %v234 = vsel %vm154, %v44, 0
    %v237 = vsel %vm154, %v45, 0
    %v240 = vsel %vm154, %v46, 0
    %v243 = vsel %vm154, %v47, 0
    %v246 = vsel %vm154, %v48, 0
    %v249 = vsel %vm154, %v49, 0
    %v252 = vsel %vm154, %v50, 0
    %v255 = vsel %vm154, %v51, 0
    %v258 = vsel %vm154, %v52, 0
    %v261 = vsel %vm154, %v53, 0
    %v264 = vsel %vm154, %v54, 0
    %v267 = vsel %vm154, %v55, 0
    %v270 = vsel %vm154, %v56, 0
    %v273 = vsel %vm154, %v57, 0
    %v276 = vsel %vm154, %v58, 0
    %v279 = vsel %vm154, %v59, 0
    %v282 = vsel %vm154, %v60, 0
    %v285 = vsel %vm154, %v61, 0
    %v288 = vsel %vm154, %v62, 0
    %v291 = vsel %vm154, %v63, 0
    %v294 = vsel %vm154, %v64, 0
    %v297 = vsel %vm154, %v65, 0
    %v300 = vsel %vm154, %v66, 0
    %v303 = vsel %vm154, %v67, 0
    %v306 = vsel %vm154, %v68, 0
    %v309 = vsel %vm154, %v69, 0
    %v312 = vsel %vm154, %v70, 0
    %v315 = vsel %vm154, %v71, 0
    %v318 = vsel %vm154, %v72, 0
    %v321 = vsel %vm154, %v73, 0
    %v324 = vsel %vm154, %v74, 0
    %v327 = vsel %vm154, %v75, 0
    %v330 = vsel %vm154, %v76, 0
    %v333 = vsel %vm154, %v77, 0
    %v336 = vsel %vm154, %v78, 0
    %v339 = vsel %vm154, %v79, 0
    %v342 = vsel %vm154, %v80, 0
    %v345 = vsel %vm154, %v81, 0
    %v348 = vsel %vm154, %v82, 0
    %v351 = vsel %vm154, %v83, 0
    %v354 = vsel %vm154, %v84, 0
    %v357 = vsel %vm154, %v85, 0
    %v360 = vsel %vm154, %v86, 0
    %v363 = vsel %vm154, %v87, 0
    %v366 = vsel %vm154, %v88, 0
    %v369 = vsel %vm154, %v89, 0
    %v372 = vsel %vm154, %v90, 0
    %v375 = vsel %vm154, %v91, 0
    %v378 = vsel %vm154, %v92, 0
    %v381 = vsel %vm154, %v93, 0
    %v384 = vsel %vm154, %v94, 0
    %v387 = vsel %vm154, %v95, 0
    %v390 = vsel %vm154, %v96, 0
    %v393 = vsel %vm154, %v97, 0
    %v396 = vsel %vm154, %v98, 0
    %v399 = vsel %vm154, %v99, 0
    %v402 = vsel %vm154, %v100, 0
    %v405 = vsel %vm154, %v101, 0
    %v408 = vsel %vm154, %v102, 0
    %v411 = vsel %vm154, %v103, 0
    %v414 = vsel %vm154, %v104, 0
    %v417 = vsel %vm154, %v105, 0
    %v420 = vsel %vm154, %v106, 0
    %v423 = vsel %vm154, %v107, 0
    %v426 = vsel %vm154, %v108, 0
    %v429 = vsel %vm154, %v109, 0
    %v432 = vsel %vm154, %v110, 0
    %v435 = vsel %vm154, %v111, 0
    %v438 = vsel %vm154, %v112, 0
    %v441 = vsel %vm154, %v113, 0
    %v444 = vsel %vm154, %v114, 0
    %v447 = vsel %vm154, %v115, 0
    %v450 = vsel %vm154, %v116, 0
    %v453 = vsel %vm154, %v117, 0
    %v456 = vsel %vm154, %v118, 0
    %v459 = vsel %vm154, %v119, 0
    %v462 = vsel %vm154, %v120, 0
    %v465 = vsel %vm154, %v121, 0
    %v468 = vsel %vm154, %v122, 0
    %v471 = vsel %vm154, %v123, 0
    %v474 = vsel %vm154, %v124, 0
    %v477 = vsel %vm154, %v125, 0
    %v480 = vsel %vm154, %v126, 0
    %v483 = vsel %vm154, %v127, 0
    %v486 = vsel %vm154, %v128, 0
    %v489 = vsel %vm154, %v129, 0
    %v492 = vsel %vm154, %v130, 0
    %v495 = vsel %vm154, %v131, 0
    %v498 = vsel %vm154, %v132, 0
    %v501 = vsel %vm154, %v133, 0
    %v504 = vsel %vm154, %v134, 0
    %v507 = vsel %vm154, %v135, 0
    %v510 = vsel %vm154, %v136, 0
    %v513 = vsel %vm154, %v137, 0
    %v516 = vsel %vm154, %v138, 0
    %v519 = vsel %vm154, %v139, 0
    %v522 = vsel %vm154, %v140, 0
    %v525 = vsel %vm154, %v141, 0
    %v528 = vsel %vm154, %v142, 0
    %v531 = vsel %vm154, %v143, 0
    %v534 = vsel %vm154, %v144, 0
    %v537 = vsel %vm154, %v145, 0
    %vm539 = vcmask 1042432
    %v541 = vsel %vm539, %v146, 0
    %543 = vmatprep.subr.mxu0 0.0
    %544 = vmatpush1.msra.mxu0 %v541
    %545 = vmatprep.subr.mxu0 0.0
    %546 = vmatpush1.msra.mxu0 0.0
    %547 = vmatprep.subr.mxu0 0.0
    %548 = vmatpush1.msra.mxu0 0.0
    %549 = vmatprep.subr.mxu0 0.0
    %550 = vmatpush1.msra.mxu0 0.0
    %551 = vmatprep.subr.mxu0 0.0
    %552 = vmatpush1.msra.mxu0 0.0
    %553 = vmatprep.subr.mxu0 0.0
    %554 = vmatpush1.msra.mxu0 0.0
    %555 = vmatprep.subr.mxu0 0.0
    %556 = vmatpush1.msra.mxu0 0.0
    %557 = vmatprep.subr.mxu0 0.0
    %558 = vmatpush1.msra.mxu0 0.0
    %559 = vmatprep.subr.mxu0 0.0
    %560 = vmatpush1.msra.mxu0 0.0
    %561 = vmatprep.subr.mxu0 0.0
    %562 = vmatpush1.msra.mxu0 0.0
    %563 = vmatprep.subr.mxu0 0.0
    %564 = vmatpush1.msra.mxu0 0.0
    %565 = vmatprep.subr.mxu0 0.0
    %566 = vmatpush1.msra.mxu0 0.0
    %567 = vmatprep.subr.mxu0 0.0
    %568 = vmatpush1.msra.mxu0 0.0
    %569 = vmatprep.subr.mxu0 0.0
    %570 = vmatpush1.msra.mxu0 0.0
    %571 = vmatprep.subr.mxu0 0.0
    %572 = vmatpush1.msra.mxu0 0.0
    %573 = vmatprep.subr.mxu0 0.0
    %574 = vmatpush1.msra.mxu0 0.0
    %575 = vmatprep.subr.mxu0 0.0
    %576 = vmatpush1.msra.mxu0 0.0
    %577 = vmatprep.subr.mxu0 0.0
    %578 = vmatpush1.msra.mxu0 0.0
    %579 = vmatprep.subr.mxu0 0.0
    %580 = vmatpush1.msra.mxu0 0.0
    %581 = vmatprep.subr.mxu0 0.0
    %582 = vmatpush1.msra.mxu0 0.0
    %583 = vmatprep.subr.mxu0 0.0
    %584 = vmatpush1.msra.mxu0 0.0
    %585 = vmatprep.subr.mxu0 0.0
    %586 = vmatpush1.msra.mxu0 0.0
    %587 = vmatprep.subr.mxu0 0.0
    %588 = vmatpush1.msra.mxu0 0.0
    %589 = vmatprep.subr.mxu0 0.0
    %590 = vmatpush1.msra.mxu0 0.0
    %591 = vmatprep.subr.mxu0 0.0
    %592 = vmatpush1.msra.mxu0 0.0
    %593 = vmatprep.subr.mxu0 0.0
    %594 = vmatpush1.msra.mxu0 0.0
    %595 = vmatprep.subr.mxu0 0.0
    %596 = vmatpush1.msra.mxu0 0.0
    %597 = vmatprep.subr.mxu0 0.0
    %598 = vmatpush1.msra.mxu0 0.0
    %599 = vmatprep.subr.mxu0 0.0
    %600 = vmatpush1.msra.mxu0 0.0
    %601 = vmatprep.subr.mxu0 0.0
    %602 = vmatpush1.msra.mxu0 0.0
    %603 = vmatprep.subr.mxu0 0.0
    %604 = vmatpush1.msra.mxu0 0.0
    %605 = vmatprep.subr.mxu0 0.0
    %606 = vmatpush1.msra.mxu0 0.0
    %607 = vmatprep.mubr.f32.mxu0 0.0
    %608 = vmatmul.mubr.f32.gmra.mrb[0].mxu0 %v156
    %v609 = vpop.f32.mrb[0].mxu0
    %v610 = vadd.f32 %v152, %v609
    %v611 = vpop.f32.mrb[0].mxu0
    %612 = vmatprep.mubr.f32.mxu0 0.0
    %613 = vmatmul.mubr.f32.gmra.mrb[0].mxu0 %v159
    %v614 = vpop.f32.mrb[0].mxu0
    %v615 = vadd.f32 %v152, %v614
    %v616 = vpop.f32.mrb[0].mxu0
    %617 = vmatprep.mubr.f32.mxu0 0.0
    %618 = vmatmul.mubr.f32.gmra.mrb[0].mxu0 %v162
    %v619 = vpop.f32.mrb[0].mxu0
    %v620 = vadd.f32 %v152, %v619
    %v621 = vpop.f32.mrb[0].mxu0
    %622 = vmatprep.mubr.f32.mxu0 0.0
    %623 = vmatmul.mubr.f32.gmra.mrb[0].mxu0 %v165
    %v624 = vpop.f32.mrb[0].mxu0
    %v625 = vadd.f32 %v152, %v624
    %v626 = vpop.f32.mrb[0].mxu0
    %627 = vmatprep.mubr.f32.mxu0 0.0
    %628 = vmatmul.mubr.f32.gmra.mrb[0].mxu0 %v168
    %v629 = vpop.f32.mrb[0].mxu0
    %v630 = vadd.f32 %v152, %v629
    %v631 = vpop.f32.mrb[0].mxu0
    %632 = vmatprep.mubr.f32.mxu0 0.0
    %633 = vmatmul.mubr.f32.gmra.mrb[0].mxu0 %v171
    %v634 = vpop.f32.mrb[0].mxu0
    %v635 = vadd.f32 %v152, %v634
    %v636 = vpop.f32.mrb[0].mxu0
    %637 = vmatprep.mubr.f32.mxu0 0.0
    %638 = vmatmul.mubr.f32.gmra.mrb[0].mxu0 %v174
    %v639 = vpop.f32.mrb[0].mxu0
    %v640 = vadd.f32 %v152, %v639
    %v641 = vpop.f32.mrb[0].mxu0
    %642 = vmatprep.mubr.f32.mxu0 0.0
    %643 = vmatmul.mubr.f32.gmra.mrb[0].mxu0 %v177
    %v644 = vpop.f32.mrb[0].mxu0
    %v645 = vadd.f32 %v152, %v644
    %v646 = vpop.f32.mrb[0].mxu0
    %647 = vmatprep.mubr.f32.mxu0 0.0
    %648 = vmatmul.mubr.f32.gmra.mrb[0].mxu0 %v180
    %v649 = vpop.f32.mrb[0].mxu0
    %v650 = vadd.f32 %v152, %v649
    %v651 = vpop.f32.mrb[0].mxu0
    %652 = vmatprep.mubr.f32.mxu0 0.0
    %653 = vmatmul.mubr.f32.gmra.mrb[0].mxu0 %v183
    %v654 = vpop.f32.mrb[0].mxu0
    %v655 = vadd.f32 %v152, %v654
    %v656 = vpop.f32.mrb[0].mxu0
    %657 = vmatprep.mubr.f32.mxu0 0.0
    %658 = vmatmul.mubr.f32.gmra.mrb[0].mxu0 %v186
    %v659 = vpop.f32.mrb[0].mxu0
    %v660 = vadd.f32 %v152, %v659
    %v661 = vpop.f32.mrb[0].mxu0
    %662 = vmatprep.mubr.f32.mxu0 0.0
    %663 = vmatmul.mubr.f32.gmra.mrb[0].mxu0 %v189
    %v664 = vpop.f32.mrb[0].mxu0
    %v665 = vadd.f32 %v152, %v664
    %v666 = vpop.f32.mrb[0].mxu0
    %667 = vmatprep.mubr.f32.mxu0 0.0
    %668 = vmatmul.mubr.f32.gmra.mrb[0].mxu0 %v192
    %v669 = vpop.f32.mrb[0].mxu0
    %v670 = vadd.f32 %v152, %v669
    %v671 = vpop.f32.mrb[0].mxu0
    %672 = vmatprep.mubr.f32.mxu0 0.0
    %673 = vmatmul.mubr.f32.gmra.mrb[0].mxu0 %v195
    %v674 = vpop.f32.mrb[0].mxu0
    %v675 = vadd.f32 %v152, %v674
    %v676 = vpop.f32.mrb[0].mxu0
    %677 = vmatprep.mubr.f32.mxu0 0.0
    %678 = vmatmul.mubr.f32.gmra.mrb[0].mxu0 %v198
    %v679 = vpop.f32.mrb[0].mxu0
    %v680 = vadd.f32 %v152, %v679
    %v681 = vpop.f32.mrb[0].mxu0
    %682 = vmatprep.mubr.f32.mxu0 0.0
    %683 = vmatmul.mubr.f32.gmra.mrb[0].mxu0 %v201
    %v684 = vpop.f32.mrb[0].mxu0
    %v685 = vadd.f32 %v152, %v684
    %v686 = vpop.f32.mrb[0].mxu0
    %687 = vmatprep.mubr.f32.mxu0 0.0
    %688 = vmatmul.mubr.f32.gmra.mrb[0].mxu0 %v204
    %v689 = vpop.f32.mrb[0].mxu0
    %v690 = vadd.f32 %v152, %v689
    %v691 = vpop.f32.mrb[0].mxu0
    %692 = vmatprep.mubr.f32.mxu0 0.0
    %693 = vmatmul.mubr.f32.gmra.mrb[0].mxu0 %v207
    %v694 = vpop.f32.mrb[0].mxu0
    %v695 = vadd.f32 %v152, %v694
    %v696 = vpop.f32.mrb[0].mxu0
    %697 = vmatprep.mubr.f32.mxu0 0.0
    %698 = vmatmul.mubr.f32.gmra.mrb[0].mxu0 %v210
    %v699 = vpop.f32.mrb[0].mxu0
    %v700 = vadd.f32 %v152, %v699
    %v701 = vpop.f32.mrb[0].mxu0
    %702 = vmatprep.mubr.f32.mxu0 0.0
    %703 = vmatmul.mubr.f32.gmra.mrb[0].mxu0 %v213
    %v704 = vpop.f32.mrb[0].mxu0
    %v705 = vadd.f32 %v152, %v704
    %v706 = vpop.f32.mrb[0].mxu0
    %707 = vmatprep.mubr.f32.mxu0 0.0
    %708 = vmatmul.mubr.f32.gmra.mrb[0].mxu0 %v216
    %v709 = vpop.f32.mrb[0].mxu0
    %v710 = vadd.f32 %v152, %v709
    %v711 = vpop.f32.mrb[0].mxu0
    %712 = vmatprep.mubr.f32.mxu0 0.0
    %713 = vmatmul.mubr.f32.gmra.mrb[0].mxu0 %v219
    %v714 = vpop.f32.mrb[0].mxu0
    %v715 = vadd.f32 %v152, %v714
    %v716 = vpop.f32.mrb[0].mxu0
    %717 = vmatprep.mubr.f32.mxu0 0.0
    %718 = vmatmul.mubr.f32.gmra.mrb[0].mxu0 %v222
    %v719 = vpop.f32.mrb[0].mxu0
    %v720 = vadd.f32 %v152, %v719
    %v721 = vpop.f32.mrb[0].mxu0
    %722 = vmatprep.mubr.f32.mxu0 0.0
    %723 = vmatmul.mubr.f32.gmra.mrb[0].mxu0 %v225
    %v724 = vpop.f32.mrb[0].mxu0
    %v725 = vadd.f32 %v152, %v724
    %v726 = vpop.f32.mrb[0].mxu0
    %727 = vmatprep.mubr.f32.mxu0 0.0
    %728 = vmatmul.mubr.f32.gmra.mrb[0].mxu0 %v228
    %v729 = vpop.f32.mrb[0].mxu0
    %v730 = vadd.f32 %v152, %v729
    %v731 = vpop.f32.mrb[0].mxu0
    %732 = vmatprep.mubr.f32.mxu0 0.0
    %733 = vmatmul.mubr.f32.gmra.mrb[0].mxu0 %v231
    %v734 = vpop.f32.mrb[0].mxu0
    %v735 = vadd.f32 %v152, %v734
    %v736 = vpop.f32.mrb[0].mxu0
    %737 = vmatprep.mubr.f32.mxu0 0.0
    %738 = vmatmul.mubr.f32.gmra.mrb[0].mxu0 %v234
    %v739 = vpop.f32.mrb[0].mxu0
    %v740 = vadd.f32 %v152, %v739
    %v741 = vpop.f32.mrb[0].mxu0
    %742 = vmatprep.mubr.f32.mxu0 0.0
    %743 = vmatmul.mubr.f32.gmra.mrb[0].mxu0 %v237
    %v744 = vpop.f32.mrb[0].mxu0
    %v745 = vadd.f32 %v152, %v744
    %v746 = vpop.f32.mrb[0].mxu0
    %747 = vmatprep.mubr.f32.mxu0 0.0
    %748 = vmatmul.mubr.f32.gmra.mrb[0].mxu0 %v240
    %v749 = vpop.f32.mrb[0].mxu0
    %v750 = vadd.f32 %v152, %v749
    %v751 = vpop.f32.mrb[0].mxu0
    %752 = vmatprep.mubr.f32.mxu0 0.0
    %753 = vmatmul.mubr.f32.gmra.mrb[0].mxu0 %v243
    %v754 = vpop.f32.mrb[0].mxu0
    %v755 = vadd.f32 %v152, %v754
    %v756 = vpop.f32.mrb[0].mxu0
    %757 = vmatprep.mubr.f32.mxu0 0.0
    %758 = vmatmul.mubr.f32.gmra.mrb[0].mxu0 %v246
    %v759 = vpop.f32.mrb[0].mxu0
    %v760 = vadd.f32 %v152, %v759
    %v761 = vpop.f32.mrb[0].mxu0
    %762 = vmatprep.mubr.f32.mxu0 0.0
    %763 = vmatmul.mubr.f32.gmra.mrb[0].mxu0 %v249
    %v764 = vpop.f32.mrb[0].mxu0
    %v765 = vadd.f32 %v152, %v764
    %v766 = vpop.f32.mrb[0].mxu0
    %767 = vmatprep.mubr.f32.mxu0 0.0
    %768 = vmatmul.mubr.f32.gmra.mrb[0].mxu0 %v252
    %v769 = vpop.f32.mrb[0].mxu0
    %v770 = vadd.f32 %v152, %v769
    %v771 = vpop.f32.mrb[0].mxu0
    %772 = vmatprep.mubr.f32.mxu0 0.0
    %773 = vmatmul.mubr.f32.gmra.mrb[0].mxu0 %v255
    %v774 = vpop.f32.mrb[0].mxu0
    %v775 = vadd.f32 %v152, %v774
    %v776 = vpop.f32.mrb[0].mxu0
    %777 = vmatprep.mubr.f32.mxu0 0.0
    %778 = vmatmul.mubr.f32.gmra.mrb[0].mxu0 %v258
    %v779 = vpop.f32.mrb[0].mxu0
    %v780 = vadd.f32 %v152, %v779
    %v781 = vpop.f32.mrb[0].mxu0
    %782 = vmatprep.mubr.f32.mxu0 0.0
    %783 = vmatmul.mubr.f32.gmra.mrb[0].mxu0 %v261
    %v784 = vpop.f32.mrb[0].mxu0
    %v785 = vadd.f32 %v152, %v784
    %v786 = vpop.f32.mrb[0].mxu0
    %787 = vmatprep.mubr.f32.mxu0 0.0
    %788 = vmatmul.mubr.f32.gmra.mrb[0].mxu0 %v264
    %v789 = vpop.f32.mrb[0].mxu0
    %v790 = vadd.f32 %v152, %v789
    %v791 = vpop.f32.mrb[0].mxu0
    %792 = vmatprep.mubr.f32.mxu0 0.0
    %793 = vmatmul.mubr.f32.gmra.mrb[0].mxu0 %v267
    %v794 = vpop.f32.mrb[0].mxu0
    %v795 = vadd.f32 %v152, %v794
    %v796 = vpop.f32.mrb[0].mxu0
    %797 = vmatprep.mubr.f32.mxu0 0.0
    %798 = vmatmul.mubr.f32.gmra.mrb[0].mxu0 %v270
    %v799 = vpop.f32.mrb[0].mxu0
    %v800 = vadd.f32 %v152, %v799
    %v801 = vpop.f32.mrb[0].mxu0
    %802 = vmatprep.mubr.f32.mxu0 0.0
    %803 = vmatmul.mubr.f32.gmra.mrb[0].mxu0 %v273
    %v804 = vpop.f32.mrb[0].mxu0
    %v805 = vadd.f32 %v152, %v804
    %v806 = vpop.f32.mrb[0].mxu0
    %807 = vmatprep.mubr.f32.mxu0 0.0
    %808 = vmatmul.mubr.f32.gmra.mrb[0].mxu0 %v276
    %v809 = vpop.f32.mrb[0].mxu0
    %v810 = vadd.f32 %v152, %v809
    %v811 = vpop.f32.mrb[0].mxu0
    %812 = vmatprep.mubr.f32.mxu0 0.0
    %813 = vmatmul.mubr.f32.gmra.mrb[0].mxu0 %v279
    %v814 = vpop.f32.mrb[0].mxu0
    %v815 = vadd.f32 %v152, %v814
    %v816 = vpop.f32.mrb[0].mxu0
    %817 = vmatprep.mubr.f32.mxu0 0.0
    %818 = vmatmul.mubr.f32.gmra.mrb[0].mxu0 %v282
    %v819 = vpop.f32.mrb[0].mxu0
    %v820 = vadd.f32 %v152, %v819
    %v821 = vpop.f32.mrb[0].mxu0
    %822 = vmatprep.mubr.f32.mxu0 0.0
    %823 = vmatmul.mubr.f32.gmra.mrb[0].mxu0 %v285
    %v824 = vpop.f32.mrb[0].mxu0
    %v825 = vadd.f32 %v152, %v824
    %v826 = vpop.f32.mrb[0].mxu0
    %827 = vmatprep.mubr.f32.mxu0 0.0
    %828 = vmatmul.mubr.f32.gmra.mrb[0].mxu0 %v288
    %v829 = vpop.f32.mrb[0].mxu0
    %v830 = vadd.f32 %v152, %v829
    %v831 = vpop.f32.mrb[0].mxu0
    %832 = vmatprep.mubr.f32.mxu0 0.0
    %833 = vmatmul.mubr.f32.gmra.mrb[0].mxu0 %v291
    %v834 = vpop.f32.mrb[0].mxu0
    %v835 = vadd.f32 %v152, %v834
    %v836 = vpop.f32.mrb[0].mxu0
    %837 = vmatprep.mubr.f32.mxu0 0.0
    %838 = vmatmul.mubr.f32.gmra.mrb[0].mxu0 %v294
    %v839 = vpop.f32.mrb[0].mxu0
    %v840 = vadd.f32 %v152, %v839
    %v841 = vpop.f32.mrb[0].mxu0
    %842 = vmatprep.mubr.f32.mxu0 0.0
    %843 = vmatmul.mubr.f32.gmra.mrb[0].mxu0 %v297
    %v844 = vpop.f32.mrb[0].mxu0
    %v845 = vadd.f32 %v152, %v844
    %v846 = vpop.f32.mrb[0].mxu0
    %847 = vmatprep.mubr.f32.mxu0 0.0
    %848 = vmatmul.mubr.f32.gmra.mrb[0].mxu0 %v300
    %v849 = vpop.f32.mrb[0].mxu0
    %v850 = vadd.f32 %v152, %v849
    %v851 = vpop.f32.mrb[0].mxu0
    %852 = vmatprep.mubr.f32.mxu0 0.0
    %853 = vmatmul.mubr.f32.gmra.mrb[0].mxu0 %v303
    %v854 = vpop.f32.mrb[0].mxu0
    %v855 = vadd.f32 %v152, %v854
    %v856 = vpop.f32.mrb[0].mxu0
    %857 = vmatprep.mubr.f32.mxu0 0.0
    %858 = vmatmul.mubr.f32.gmra.mrb[0].mxu0 %v306
    %v859 = vpop.f32.mrb[0].mxu0
    %v860 = vadd.f32 %v152, %v859
    %v861 = vpop.f32.mrb[0].mxu0
    %862 = vmatprep.mubr.f32.mxu0 0.0
    %863 = vmatmul.mubr.f32.gmra.mrb[0].mxu0 %v309
    %v864 = vpop.f32.mrb[0].mxu0
    %v865 = vadd.f32 %v152, %v864
    %v866 = vpop.f32.mrb[0].mxu0
    %867 = vmatprep.mubr.f32.mxu0 0.0
    %868 = vmatmul.mubr.f32.gmra.mrb[0].mxu0 %v312
    %v869 = vpop.f32.mrb[0].mxu0
    %v870 = vadd.f32 %v152, %v869
    %v871 = vpop.f32.mrb[0].mxu0
    %872 = vmatprep.mubr.f32.mxu0 0.0
    %873 = vmatmul.mubr.f32.gmra.mrb[0].mxu0 %v315
    %v874 = vpop.f32.mrb[0].mxu0
    %v875 = vadd.f32 %v152, %v874
    %v876 = vpop.f32.mrb[0].mxu0
    %877 = vmatprep.mubr.f32.mxu0 0.0
    %878 = vmatmul.mubr.f32.gmra.mrb[0].mxu0 %v318
    %v879 = vpop.f32.mrb[0].mxu0
    %v880 = vadd.f32 %v152, %v879
    %v881 = vpop.f32.mrb[0].mxu0
    %882 = vmatprep.mubr.f32.mxu0 0.0
    %883 = vmatmul.mubr.f32.gmra.mrb[0].mxu0 %v321
    %v884 = vpop.f32.mrb[0].mxu0
    %v885 = vadd.f32 %v152, %v884
    %v886 = vpop.f32.mrb[0].mxu0
    %887 = vmatprep.mubr.f32.mxu0 0.0
    %888 = vmatmul.mubr.f32.gmra.mrb[0].mxu0 %v324
    %v889 = vpop.f32.mrb[0].mxu0
    %v890 = vadd.f32 %v152, %v889
    %v891 = vpop.f32.mrb[0].mxu0
    %892 = vmatprep.mubr.f32.mxu0 0.0
    %893 = vmatmul.mubr.f32.gmra.mrb[0].mxu0 %v327
    %v894 = vpop.f32.mrb[0].mxu0
    %v895 = vadd.f32 %v152, %v894
    %v896 = vpop.f32.mrb[0].mxu0
    %897 = vmatprep.mubr.f32.mxu0 0.0
    %898 = vmatmul.mubr.f32.gmra.mrb[0].mxu0 %v330
    %v899 = vpop.f32.mrb[0].mxu0
    %v900 = vadd.f32 %v152, %v899
    %v901 = vpop.f32.mrb[0].mxu0
    %902 = vmatprep.mubr.f32.mxu0 0.0
    %903 = vmatmul.mubr.f32.gmra.mrb[0].mxu0 %v333
    %v904 = vpop.f32.mrb[0].mxu0
    %v905 = vadd.f32 %v152, %v904
    %v906 = vpop.f32.mrb[0].mxu0
    %907 = vmatprep.mubr.f32.mxu0 0.0
    %908 = vmatmul.mubr.f32.gmra.mrb[0].mxu0 %v336
    %v909 = vpop.f32.mrb[0].mxu0
    %v910 = vadd.f32 %v152, %v909
    %v911 = vpop.f32.mrb[0].mxu0
    %912 = vmatprep.mubr.f32.mxu0 0.0
    %913 = vmatmul.mubr.f32.gmra.mrb[0].mxu0 %v339
    %v914 = vpop.f32.mrb[0].mxu0
    %v915 = vadd.f32 %v152, %v914
    %v916 = vpop.f32.mrb[0].mxu0
    %917 = vmatprep.mubr.f32.mxu0 0.0
    %918 = vmatmul.mubr.f32.gmra.mrb[0].mxu0 %v342
    %v919 = vpop.f32.mrb[0].mxu0
    %v920 = vadd.f32 %v152, %v919
    %v921 = vpop.f32.mrb[0].mxu0
    %922 = vmatprep.mubr.f32.mxu0 0.0
    %923 = vmatmul.mubr.f32.gmra.mrb[0].mxu0 %v345
    %v924 = vpop.f32.mrb[0].mxu0
    %v925 = vadd.f32 %v152, %v924
    %v926 = vpop.f32.mrb[0].mxu0
    %927 = vmatprep.mubr.f32.mxu0 0.0
    %928 = vmatmul.mubr.f32.gmra.mrb[0].mxu0 %v348
    %v929 = vpop.f32.mrb[0].mxu0
    %v930 = vadd.f32 %v152, %v929
    %v931 = vpop.f32.mrb[0].mxu0
    %932 = vmatprep.mubr.f32.mxu0 0.0
    %933 = vmatmul.mubr.f32.gmra.mrb[0].mxu0 %v351
    %v934 = vpop.f32.mrb[0].mxu0
    %v935 = vadd.f32 %v152, %v934
    %v936 = vpop.f32.mrb[0].mxu0
    %937 = vmatprep.mubr.f32.mxu0 0.0
    %938 = vmatmul.mubr.f32.gmra.mrb[0].mxu0 %v354
    %v939 = vpop.f32.mrb[0].mxu0
    %v940 = vadd.f32 %v152, %v939
    %v941 = vpop.f32.mrb[0].mxu0
    %942 = vmatprep.mubr.f32.mxu0 0.0
    %943 = vmatmul.mubr.f32.gmra.mrb[0].mxu0 %v357
    %v944 = vpop.f32.mrb[0].mxu0
    %v945 = vadd.f32 %v152, %v944
    %v946 = vpop.f32.mrb[0].mxu0
    %947 = vmatprep.mubr.f32.mxu0 0.0
    %948 = vmatmul.mubr.f32.gmra.mrb[0].mxu0 %v360
    %v949 = vpop.f32.mrb[0].mxu0
    %v950 = vadd.f32 %v152, %v949
    %v951 = vpop.f32.mrb[0].mxu0
    %952 = vmatprep.mubr.f32.mxu0 0.0
    %953 = vmatmul.mubr.f32.gmra.mrb[0].mxu0 %v363
    %v954 = vpop.f32.mrb[0].mxu0
    %v955 = vadd.f32 %v152, %v954
    %v956 = vpop.f32.mrb[0].mxu0
    %957 = vmatprep.mubr.f32.mxu0 0.0
    %958 = vmatmul.mubr.f32.gmra.mrb[0].mxu0 %v366
    %v959 = vpop.f32.mrb[0].mxu0
    %v960 = vadd.f32 %v152, %v959
    %v961 = vpop.f32.mrb[0].mxu0
    %962 = vmatprep.mubr.f32.mxu0 0.0
    %963 = vmatmul.mubr.f32.gmra.mrb[0].mxu0 %v369
    %v964 = vpop.f32.mrb[0].mxu0
    %v965 = vadd.f32 %v152, %v964
    %v966 = vpop.f32.mrb[0].mxu0
    %967 = vmatprep.mubr.f32.mxu0 0.0
    %968 = vmatmul.mubr.f32.gmra.mrb[0].mxu0 %v372
    %v969 = vpop.f32.mrb[0].mxu0
    %v970 = vadd.f32 %v152, %v969
    %v971 = vpop.f32.mrb[0].mxu0
    %972 = vmatprep.mubr.f32.mxu0 0.0
    %973 = vmatmul.mubr.f32.gmra.mrb[0].mxu0 %v375
    %v974 = vpop.f32.mrb[0].mxu0
    %v975 = vadd.f32 %v152, %v974
    %v976 = vpop.f32.mrb[0].mxu0
    %977 = vmatprep.mubr.f32.mxu0 0.0
    %978 = vmatmul.mubr.f32.gmra.mrb[0].mxu0 %v378
    %v979 = vpop.f32.mrb[0].mxu0
    %v980 = vadd.f32 %v152, %v979
    %v981 = vpop.f32.mrb[0].mxu0
    %982 = vmatprep.mubr.f32.mxu0 0.0
    %983 = vmatmul.mubr.f32.gmra.mrb[0].mxu0 %v381
    %v984 = vpop.f32.mrb[0].mxu0
    %v985 = vadd.f32 %v152, %v984
    %v986 = vpop.f32.mrb[0].mxu0
    %987 = vmatprep.mubr.f32.mxu0 0.0
    %988 = vmatmul.mubr.f32.gmra.mrb[0].mxu0 %v384
    %v989 = vpop.f32.mrb[0].mxu0
    %v990 = vadd.f32 %v152, %v989
    %v991 = vpop.f32.mrb[0].mxu0
    %992 = vmatprep.mubr.f32.mxu0 0.0
    %993 = vmatmul.mubr.f32.gmra.mrb[0].mxu0 %v387
    %v994 = vpop.f32.mrb[0].mxu0
    %v995 = vadd.f32 %v152, %v994
    %v996 = vpop.f32.mrb[0].mxu0
    %997 = vmatprep.mubr.f32.mxu0 0.0
    %998 = vmatmul.mubr.f32.gmra.mrb[0].mxu0 %v390
    %v999 = vpop.f32.mrb[0].mxu0
    %v1000 = vadd.f32 %v152, %v999
    %v1001 = vpop.f32.mrb[0].mxu0
    %1002 = vmatprep.mubr.f32.mxu0 0.0
    %1003 = vmatmul.mubr.f32.gmra.mrb[0].mxu0 %v393
    %v1004 = vpop.f32.mrb[0].mxu0
    %v1005 = vadd.f32 %v152, %v1004
    %v1006 = vpop.f32.mrb[0].mxu0
    %1007 = vmatprep.mubr.f32.mxu0 0.0
    %1008 = vmatmul.mubr.f32.gmra.mrb[0].mxu0 %v396
    %v1009 = vpop.f32.mrb[0].mxu0
    %v1010 = vadd.f32 %v152, %v1009
    %v1011 = vpop.f32.mrb[0].mxu0
    %1012 = vmatprep.mubr.f32.mxu0 0.0
    %1013 = vmatmul.mubr.f32.gmra.mrb[0].mxu0 %v399
    %v1014 = vpop.f32.mrb[0].mxu0
    %v1015 = vadd.f32 %v152, %v1014
    %v1016 = vpop.f32.mrb[0].mxu0
    %1017 = vmatprep.mubr.f32.mxu0 0.0
    %1018 = vmatmul.mubr.f32.gmra.mrb[0].mxu0 %v402
    %v1019 = vpop.f32.mrb[0].mxu0
    %v1020 = vadd.f32 %v152, %v1019
    %v1021 = vpop.f32.mrb[0].mxu0
    %1022 = vmatprep.mubr.f32.mxu0 0.0
    %1023 = vmatmul.mubr.f32.gmra.mrb[0].mxu0 %v405
    %v1024 = vpop.f32.mrb[0].mxu0
    %v1025 = vadd.f32 %v152, %v1024
    %v1026 = vpop.f32.mrb[0].mxu0
    %1027 = vmatprep.mubr.f32.mxu0 0.0
    %1028 = vmatmul.mubr.f32.gmra.mrb[0].mxu0 %v408
    %v1029 = vpop.f32.mrb[0].mxu0
    %v1030 = vadd.f32 %v152, %v1029
    %v1031 = vpop.f32.mrb[0].mxu0
    %1032 = vmatprep.mubr.f32.mxu0 0.0
    %1033 = vmatmul.mubr.f32.gmra.mrb[0].mxu0 %v411
    %v1034 = vpop.f32.mrb[0].mxu0
    %v1035 = vadd.f32 %v152, %v1034
    %v1036 = vpop.f32.mrb[0].mxu0
    %1037 = vmatprep.mubr.f32.mxu0 0.0
    %1038 = vmatmul.mubr.f32.gmra.mrb[0].mxu0 %v414
    %v1039 = vpop.f32.mrb[0].mxu0
    %v1040 = vadd.f32 %v152, %v1039
    %v1041 = vpop.f32.mrb[0].mxu0
    %1042 = vmatprep.mubr.f32.mxu0 0.0
    %1043 = vmatmul.mubr.f32.gmra.mrb[0].mxu0 %v417
    %v1044 = vpop.f32.mrb[0].mxu0
    %v1045 = vadd.f32 %v152, %v1044
    %v1046 = vpop.f32.mrb[0].mxu0
    %1047 = vmatprep.mubr.f32.mxu0 0.0
    %1048 = vmatmul.mubr.f32.gmra.mrb[0].mxu0 %v420
    %v1049 = vpop.f32.mrb[0].mxu0
    %v1050 = vadd.f32 %v152, %v1049
    %v1051 = vpop.f32.mrb[0].mxu0
    %1052 = vmatprep.mubr.f32.mxu0 0.0
    %1053 = vmatmul.mubr.f32.gmra.mrb[0].mxu0 %v423
    %v1054 = vpop.f32.mrb[0].mxu0
    %v1055 = vadd.f32 %v152, %v1054
    %v1056 = vpop.f32.mrb[0].mxu0
    %1057 = vmatprep.mubr.f32.mxu0 0.0
    %1058 = vmatmul.mubr.f32.gmra.mrb[0].mxu0 %v426
    %v1059 = vpop.f32.mrb[0].mxu0
    %v1060 = vadd.f32 %v152, %v1059
    %v1061 = vpop.f32.mrb[0].mxu0
    %1062 = vmatprep.mubr.f32.mxu0 0.0
    %1063 = vmatmul.mubr.f32.gmra.mrb[0].mxu0 %v429
    %v1064 = vpop.f32.mrb[0].mxu0
    %v1065 = vadd.f32 %v152, %v1064
    %v1066 = vpop.f32.mrb[0].mxu0
    %1067 = vmatprep.mubr.f32.mxu0 0.0
    %1068 = vmatmul.mubr.f32.gmra.mrb[0].mxu0 %v432
    %v1069 = vpop.f32.mrb[0].mxu0
    %v1070 = vadd.f32 %v152, %v1069
    %v1071 = vpop.f32.mrb[0].mxu0
    %1072 = vmatprep.mubr.f32.mxu0 0.0
    %1073 = vmatmul.mubr.f32.gmra.mrb[0].mxu0 %v435
    %v1074 = vpop.f32.mrb[0].mxu0
    %v1075 = vadd.f32 %v152, %v1074
    %v1076 = vpop.f32.mrb[0].mxu0
    %1077 = vmatprep.mubr.f32.mxu0 0.0
    %1078 = vmatmul.mubr.f32.gmra.mrb[0].mxu0 %v438
    %v1079 = vpop.f32.mrb[0].mxu0
    %v1080 = vadd.f32 %v152, %v1079
    %v1081 = vpop.f32.mrb[0].mxu0
    %1082 = vmatprep.mubr.f32.mxu0 0.0
    %1083 = vmatmul.mubr.f32.gmra.mrb[0].mxu0 %v441
    %v1084 = vpop.f32.mrb[0].mxu0
    %v1085 = vadd.f32 %v152, %v1084
    %v1086 = vpop.f32.mrb[0].mxu0
    %1087 = vmatprep.mubr.f32.mxu0 0.0
    %1088 = vmatmul.mubr.f32.gmra.mrb[0].mxu0 %v444
    %v1089 = vpop.f32.mrb[0].mxu0
    %v1090 = vadd.f32 %v152, %v1089
    %v1091 = vpop.f32.mrb[0].mxu0
    %1092 = vmatprep.mubr.f32.mxu0 0.0
    %1093 = vmatmul.mubr.f32.gmra.mrb[0].mxu0 %v447
    %v1094 = vpop.f32.mrb[0].mxu0
    %v1095 = vadd.f32 %v152, %v1094
    %v1096 = vpop.f32.mrb[0].mxu0
    %1097 = vmatprep.mubr.f32.mxu0 0.0
    %1098 = vmatmul.mubr.f32.gmra.mrb[0].mxu0 %v450
    %v1099 = vpop.f32.mrb[0].mxu0
    %v1100 = vadd.f32 %v152, %v1099
    %v1101 = vpop.f32.mrb[0].mxu0
    %1102 = vmatprep.mubr.f32.mxu0 0.0
    %1103 = vmatmul.mubr.f32.gmra.mrb[0].mxu0 %v453
    %v1104 = vpop.f32.mrb[0].mxu0
    %v1105 = vadd.f32 %v152, %v1104
    %v1106 = vpop.f32.mrb[0].mxu0
    %1107 = vmatprep.mubr.f32.mxu0 0.0
    %1108 = vmatmul.mubr.f32.gmra.mrb[0].mxu0 %v456
    %v1109 = vpop.f32.mrb[0].mxu0
    %v1110 = vadd.f32 %v152, %v1109
    %v1111 = vpop.f32.mrb[0].mxu0
    %1112 = vmatprep.mubr.f32.mxu0 0.0
    %1113 = vmatmul.mubr.f32.gmra.mrb[0].mxu0 %v459
    %v1114 = vpop.f32.mrb[0].mxu0
    %v1115 = vadd.f32 %v152, %v1114
    %v1116 = vpop.f32.mrb[0].mxu0
    %1117 = vmatprep.mubr.f32.mxu0 0.0
    %1118 = vmatmul.mubr.f32.gmra.mrb[0].mxu0 %v462
    %v1119 = vpop.f32.mrb[0].mxu0
    %v1120 = vadd.f32 %v152, %v1119
    %v1121 = vpop.f32.mrb[0].mxu0
    %1122 = vmatprep.mubr.f32.mxu0 0.0
    %1123 = vmatmul.mubr.f32.gmra.mrb[0].mxu0 %v465
    %v1124 = vpop.f32.mrb[0].mxu0
    %v1125 = vadd.f32 %v152, %v1124
    %v1126 = vpop.f32.mrb[0].mxu0
    %1127 = vmatprep.mubr.f32.mxu0 0.0
    %1128 = vmatmul.mubr.f32.gmra.mrb[0].mxu0 %v468
    %v1129 = vpop.f32.mrb[0].mxu0
    %v1130 = vadd.f32 %v152, %v1129
    %v1131 = vpop.f32.mrb[0].mxu0
    %1132 = vmatprep.mubr.f32.mxu0 0.0
    %1133 = vmatmul.mubr.f32.gmra.mrb[0].mxu0 %v471
    %v1134 = vpop.f32.mrb[0].mxu0
    %v1135 = vadd.f32 %v152, %v1134
    %v1136 = vpop.f32.mrb[0].mxu0
    %1137 = vmatprep.mubr.f32.mxu0 0.0
    %1138 = vmatmul.mubr.f32.gmra.mrb[0].mxu0 %v474
    %v1139 = vpop.f32.mrb[0].mxu0
    %v1140 = vadd.f32 %v152, %v1139
    %v1141 = vpop.f32.mrb[0].mxu0
    %1142 = vmatprep.mubr.f32.mxu0 0.0
    %1143 = vmatmul.mubr.f32.gmra.mrb[0].mxu0 %v477
    %v1144 = vpop.f32.mrb[0].mxu0
    %v1145 = vadd.f32 %v152, %v1144
    %v1146 = vpop.f32.mrb[0].mxu0
    %1147 = vmatprep.mubr.f32.mxu0 0.0
    %1148 = vmatmul.mubr.f32.gmra.mrb[0].mxu0 %v480
    %v1149 = vpop.f32.mrb[0].mxu0
    %v1150 = vadd.f32 %v152, %v1149
    %v1151 = vpop.f32.mrb[0].mxu0
    %1152 = vmatprep.mubr.f32.mxu0 0.0
    %1153 = vmatmul.mubr.f32.gmra.mrb[0].mxu0 %v483
    %v1154 = vpop.f32.mrb[0].mxu0
    %v1155 = vadd.f32 %v152, %v1154
    %v1156 = vpop.f32.mrb[0].mxu0
    %1157 = vmatprep.mubr.f32.mxu0 0.0
    %1158 = vmatmul.mubr.f32.gmra.mrb[0].mxu0 %v486
    %v1159 = vpop.f32.mrb[0].mxu0
    %v1160 = vadd.f32 %v152, %v1159
    %v1161 = vpop.f32.mrb[0].mxu0
    %1162 = vmatprep.mubr.f32.mxu0 0.0
    %1163 = vmatmul.mubr.f32.gmra.mrb[0].mxu0 %v489
    %v1164 = vpop.f32.mrb[0].mxu0
    %v1165 = vadd.f32 %v152, %v1164
    %v1166 = vpop.f32.mrb[0].mxu0
    %1167 = vmatprep.mubr.f32.mxu0 0.0
    %1168 = vmatmul.mubr.f32.gmra.mrb[0].mxu0 %v492
    %v1169 = vpop.f32.mrb[0].mxu0
    %v1170 = vadd.f32 %v152, %v1169
    %v1171 = vpop.f32.mrb[0].mxu0
    %1172 = vmatprep.mubr.f32.mxu0 0.0
    %1173 = vmatmul.mubr.f32.gmra.mrb[0].mxu0 %v495
    %v1174 = vpop.f32.mrb[0].mxu0
    %v1175 = vadd.f32 %v152, %v1174
    %v1176 = vpop.f32.mrb[0].mxu0
    %1177 = vmatprep.mubr.f32.mxu0 0.0
    %1178 = vmatmul.mubr.f32.gmra.mrb[0].mxu0 %v498
    %v1179 = vpop.f32.mrb[0].mxu0
    %v1180 = vadd.f32 %v152, %v1179
    %v1181 = vpop.f32.mrb[0].mxu0
    %1182 = vmatprep.mubr.f32.mxu0 0.0
    %1183 = vmatmul.mubr.f32.gmra.mrb[0].mxu0 %v501
    %v1184 = vpop.f32.mrb[0].mxu0
    %v1185 = vadd.f32 %v152, %v1184
    %v1186 = vpop.f32.mrb[0].mxu0
    %1187 = vmatprep.mubr.f32.mxu0 0.0
    %1188 = vmatmul.mubr.f32.gmra.mrb[0].mxu0 %v504
    %v1189 = vpop.f32.mrb[0].mxu0
    %v1190 = vadd.f32 %v152, %v1189
    %v1191 = vpop.f32.mrb[0].mxu0
    %1192 = vmatprep.mubr.f32.mxu0 0.0
    %1193 = vmatmul.mubr.f32.gmra.mrb[0].mxu0 %v507
    %v1194 = vpop.f32.mrb[0].mxu0
    %v1195 = vadd.f32 %v152, %v1194
    %v1196 = vpop.f32.mrb[0].mxu0
    %1197 = vmatprep.mubr.f32.mxu0 0.0
    %1198 = vmatmul.mubr.f32.gmra.mrb[0].mxu0 %v510
    %v1199 = vpop.f32.mrb[0].mxu0
    %v1200 = vadd.f32 %v152, %v1199
    %v1201 = vpop.f32.mrb[0].mxu0
    %1202 = vmatprep.mubr.f32.mxu0 0.0
    %1203 = vmatmul.mubr.f32.gmra.mrb[0].mxu0 %v513
    %v1204 = vpop.f32.mrb[0].mxu0
    %v1205 = vadd.f32 %v152, %v1204
    %v1206 = vpop.f32.mrb[0].mxu0
    %1207 = vmatprep.mubr.f32.mxu0 0.0
    %1208 = vmatmul.mubr.f32.gmra.mrb[0].mxu0 %v516
    %v1209 = vpop.f32.mrb[0].mxu0
    %v1210 = vadd.f32 %v152, %v1209
    %v1211 = vpop.f32.mrb[0].mxu0
    %1212 = vmatprep.mubr.f32.mxu0 0.0
    %1213 = vmatmul.mubr.f32.gmra.mrb[0].mxu0 %v519
    %v1214 = vpop.f32.mrb[0].mxu0
    %v1215 = vadd.f32 %v152, %v1214
    %v1216 = vpop.f32.mrb[0].mxu0
    %1217 = vmatprep.mubr.f32.mxu0 0.0
    %1218 = vmatmul.mubr.f32.gmra.mrb[0].mxu0 %v522
    %v1219 = vpop.f32.mrb[0].mxu0
    %v1220 = vadd.f32 %v152, %v1219
    %v1221 = vpop.f32.mrb[0].mxu0
    %1222 = vmatprep.mubr.f32.mxu0 0.0
    %1223 = vmatmul.mubr.f32.gmra.mrb[0].mxu0 %v525
    %v1224 = vpop.f32.mrb[0].mxu0
    %v1225 = vadd.f32 %v152, %v1224
    %v1226 = vpop.f32.mrb[0].mxu0
    %1227 = vmatprep.mubr.f32.mxu0 0.0
    %1228 = vmatmul.mubr.f32.gmra.mrb[0].mxu0 %v528
    %v1229 = vpop.f32.mrb[0].mxu0
    %v1230 = vadd.f32 %v152, %v1229
    %v1231 = vpop.f32.mrb[0].mxu0
    %1232 = vmatprep.mubr.f32.mxu0 0.0
    %1233 = vmatmul.mubr.f32.gmra.mrb[0].mxu0 %v531
    %v1234 = vpop.f32.mrb[0].mxu0
    %v1235 = vadd.f32 %v152, %v1234
    %v1236 = vpop.f32.mrb[0].mxu0
    %1237 = vmatprep.mubr.f32.mxu0 0.0
    %1238 = vmatmul.mubr.f32.gmra.mrb[0].mxu0 %v534
    %v1239 = vpop.f32.mrb[0].mxu0
    %v1240 = vadd.f32 %v152, %v1239
    %v1241 = vpop.f32.mrb[0].mxu0
    %1242 = vmatprep.mubr.f32.mxu0 0.0
    %1243 = vmatmul.mubr.f32.gmra.mrb[0].mxu0 %v537
    %v1244 = vpop.f32.mrb[0].mxu0
    %v1245 = vadd.f32 %v152, %v1244
    %v1246 = vpop.f32.mrb[0].mxu0
    %1247 = vdwg.mxu0
    %p1248 = scmp.eq.s32.totalorder 0, 0
    // Predicated region
    $region14: #{tpu_custom_call.1} parent=1 // pred_check
      %p1249 = pneg %p1248
    $region15: #{tpu_custom_call.1} parent=1 // pred_check_branch
      %1251 = sbr.rel (%p1249) target = $region17
    $region16: #{tpu_custom_call.1} parent=1 // pred_region
      %vm1252 = vcmask 57344
      %1253 = vst.msk [vmem:[#allocation2] sm:$0x1] %vm1252, 0.0
      %1254 = vst.msk [vmem:[#allocation4] sm:$0x1] %vm1252, 0.0
    $region17: #{tpu_custom_call.1} parent=1 // pred_fallthru
      _
    %v1255 = vld [vmem:[#allocation2] sm:$0x1]
    %vm1256 = vcmask 64512
    %v1257 = vsel %vm1256, %v610, 0.0
    %v1258 = vsel %vm1256, %v615, 0.0
    %v1259 = vadd.f32 %v1257, %v1258
    %v1260 = vsel %vm1256, %v620, 0.0
    %v1261 = vadd.f32 %v1259, %v1260
    %v1262 = vsel %vm1256, %v625, 0.0
    %v1263 = vadd.f32 %v1261, %v1262
    %v1264 = vsel %vm1256, %v630, 0.0
    %v1265 = vadd.f32 %v1263, %v1264
    %v1266 = vsel %vm1256, %v635, 0.0
    %v1267 = vadd.f32 %v1265, %v1266
    %v1268 = vsel %vm1256, %v640, 0.0
    %v1269 = vadd.f32 %v1267, %v1268
    %v1270 = vsel %vm1256, %v645, 0.0
    %v1271 = vadd.f32 %v1269, %v1270
    %v1272 = vsel %vm1256, %v650, 0.0
    %v1273 = vadd.f32 %v1271, %v1272
    %v1274 = vsel %vm1256, %v655, 0.0
    %v1275 = vadd.f32 %v1273, %v1274
    %v1276 = vsel %vm1256, %v660, 0.0
    %v1277 = vadd.f32 %v1275, %v1276
    %v1278 = vsel %vm1256, %v665, 0.0
    %v1279 = vadd.f32 %v1277, %v1278
    %v1280 = vsel %vm1256, %v670, 0.0
    %v1281 = vadd.f32 %v1279, %v1280
    %v1282 = vsel %vm1256, %v675, 0.0
    %v1283 = vadd.f32 %v1281, %v1282
    %v1284 = vsel %vm1256, %v680, 0.0
    %v1285 = vadd.f32 %v1283, %v1284
    %v1286 = vsel %vm1256, %v685, 0.0
    %v1287 = vadd.f32 %v1285, %v1286
    %v1288 = vsel %vm1256, %v690, 0.0
    %v1289 = vadd.f32 %v1287, %v1288
    %v1290 = vsel %vm1256, %v695, 0.0
    %v1291 = vadd.f32 %v1289, %v1290
    %v1292 = vsel %vm1256, %v700, 0.0
    %v1293 = vadd.f32 %v1291, %v1292
    %v1294 = vsel %vm1256, %v705, 0.0
    %v1295 = vadd.f32 %v1293, %v1294
    %v1296 = vsel %vm1256, %v710, 0.0
    %v1297 = vadd.f32 %v1295, %v1296
    %v1298 = vsel %vm1256, %v715, 0.0
    %v1299 = vadd.f32 %v1297, %v1298
    %v1300 = vsel %vm1256, %v720, 0.0
    %v1301 = vadd.f32 %v1299, %v1300
    %v1302 = vsel %vm1256, %v725, 0.0
    %v1303 = vadd.f32 %v1301, %v1302
    %v1304 = vsel %vm1256, %v730, 0.0
    %v1305 = vadd.f32 %v1303, %v1304
    %v1306 = vsel %vm1256, %v735, 0.0
    %v1307 = vadd.f32 %v1305, %v1306
    %v1308 = vsel %vm1256, %v740, 0.0
    %v1309 = vadd.f32 %v1307, %v1308
    %v1310 = vsel %vm1256, %v745, 0.0
    %v1311 = vadd.f32 %v1309, %v1310
    %v1312 = vsel %vm1256, %v750, 0.0
    %v1313 = vadd.f32 %v1311, %v1312
    %v1314 = vsel %vm1256, %v755, 0.0
    %v1315 = vadd.f32 %v1313, %v1314
    %v1316 = vsel %vm1256, %v760, 0.0
    %v1317 = vadd.f32 %v1315, %v1316
    %v1318 = vsel %vm1256, %v765, 0.0
    %v1319 = vadd.f32 %v1317, %v1318
    %v1320 = vsel %vm1256, %v770, 0.0
    %v1321 = vadd.f32 %v1319, %v1320
    %v1322 = vsel %vm1256, %v775, 0.0
    %v1323 = vadd.f32 %v1321, %v1322
    %v1324 = vsel %vm1256, %v780, 0.0
    %v1325 = vadd.f32 %v1323, %v1324
    %v1326 = vsel %vm1256, %v785, 0.0
    %v1327 = vadd.f32 %v1325, %v1326
    %v1328 = vsel %vm1256, %v790, 0.0
    %v1329 = vadd.f32 %v1327, %v1328
    %v1330 = vsel %vm1256, %v795, 0.0
    %v1331 = vadd.f32 %v1329, %v1330
    %v1332 = vsel %vm1256, %v800, 0.0
    %v1333 = vadd.f32 %v1331, %v1332
    %v1334 = vsel %vm1256, %v805, 0.0
    %v1335 = vadd.f32 %v1333, %v1334
    %v1336 = vsel %vm1256, %v810, 0.0
    %v1337 = vadd.f32 %v1335, %v1336
    %v1338 = vsel %vm1256, %v815, 0.0
    %v1339 = vadd.f32 %v1337, %v1338
    %v1340 = vsel %vm1256, %v820, 0.0
    %v1341 = vadd.f32 %v1339, %v1340
    %v1342 = vsel %vm1256, %v825, 0.0
    %v1343 = vadd.f32 %v1341, %v1342
    %v1344 = vsel %vm1256, %v830, 0.0
    %v1345 = vadd.f32 %v1343, %v1344
    %v1346 = vsel %vm1256, %v835, 0.0
    %v1347 = vadd.f32 %v1345, %v1346
    %v1348 = vsel %vm1256, %v840, 0.0
    %v1349 = vadd.f32 %v1347, %v1348
    %v1350 = vsel %vm1256, %v845, 0.0
    %v1351 = vadd.f32 %v1349, %v1350
    %v1352 = vsel %vm1256, %v850, 0.0
    %v1353 = vadd.f32 %v1351, %v1352
    %v1354 = vsel %vm1256, %v855, 0.0
    %v1355 = vadd.f32 %v1353, %v1354
    %v1356 = vsel %vm1256, %v860, 0.0
    %v1357 = vadd.f32 %v1355, %v1356
    %v1358 = vsel %vm1256, %v865, 0.0
    %v1359 = vadd.f32 %v1357, %v1358
    %v1360 = vsel %vm1256, %v870, 0.0
    %v1361 = vadd.f32 %v1359, %v1360
    %v1362 = vsel %vm1256, %v875, 0.0
    %v1363 = vadd.f32 %v1361, %v1362
    %v1364 = vsel %vm1256, %v880, 0.0
    %v1365 = vadd.f32 %v1363, %v1364
    %v1366 = vsel %vm1256, %v885, 0.0
    %v1367 = vadd.f32 %v1365, %v1366
    %v1368 = vsel %vm1256, %v890, 0.0
    %v1369 = vadd.f32 %v1367, %v1368
    %v1370 = vsel %vm1256, %v895, 0.0
    %v1371 = vadd.f32 %v1369, %v1370
    %v1372 = vsel %vm1256, %v900, 0.0
    %v1373 = vadd.f32 %v1371, %v1372
    %v1374 = vsel %vm1256, %v905, 0.0
    %v1375 = vadd.f32 %v1373, %v1374
    %v1376 = vsel %vm1256, %v910, 0.0
    %v1377 = vadd.f32 %v1375, %v1376
    %v1378 = vsel %vm1256, %v915, 0.0
    %v1379 = vadd.f32 %v1377, %v1378
    %v1380 = vsel %vm1256, %v920, 0.0
    %v1381 = vadd.f32 %v1379, %v1380
    %v1382 = vsel %vm1256, %v925, 0.0
    %v1383 = vadd.f32 %v1381, %v1382
    %v1384 = vsel %vm1256, %v930, 0.0
    %v1385 = vadd.f32 %v1383, %v1384
    %v1386 = vsel %vm1256, %v935, 0.0
    %v1387 = vadd.f32 %v1385, %v1386
    %v1388 = vsel %vm1256, %v940, 0.0
    %v1389 = vadd.f32 %v1387, %v1388
    %v1390 = vsel %vm1256, %v945, 0.0
    %v1391 = vadd.f32 %v1389, %v1390
    %v1392 = vsel %vm1256, %v950, 0.0
    %v1393 = vadd.f32 %v1391, %v1392
    %v1394 = vsel %vm1256, %v955, 0.0
    %v1395 = vadd.f32 %v1393, %v1394
    %v1396 = vsel %vm1256, %v960, 0.0
    %v1397 = vadd.f32 %v1395, %v1396
    %v1398 = vsel %vm1256, %v965, 0.0
    %v1399 = vadd.f32 %v1397, %v1398
    %v1400 = vsel %vm1256, %v970, 0.0
    %v1401 = vadd.f32 %v1399, %v1400
    %v1402 = vsel %vm1256, %v975, 0.0
    %v1403 = vadd.f32 %v1401, %v1402
    %v1404 = vsel %vm1256, %v980, 0.0
    %v1405 = vadd.f32 %v1403, %v1404
    %v1406 = vsel %vm1256, %v985, 0.0
    %v1407 = vadd.f32 %v1405, %v1406
    %v1408 = vsel %vm1256, %v990, 0.0
    %v1409 = vadd.f32 %v1407, %v1408
    %v1410 = vsel %vm1256, %v995, 0.0
    %v1411 = vadd.f32 %v1409, %v1410
    %v1412 = vsel %vm1256, %v1000, 0.0
    %v1413 = vadd.f32 %v1411, %v1412
    %v1414 = vsel %vm1256, %v1005, 0.0
    %v1415 = vadd.f32 %v1413, %v1414
    %v1416 = vsel %vm1256, %v1010, 0.0
    %v1417 = vadd.f32 %v1415, %v1416
    %v1418 = vsel %vm1256, %v1015, 0.0
    %v1419 = vadd.f32 %v1417, %v1418
    %v1420 = vsel %vm1256, %v1020, 0.0
    %v1421 = vadd.f32 %v1419, %v1420
    %v1422 = vsel %vm1256, %v1025, 0.0
    %v1423 = vadd.f32 %v1421, %v1422
    %v1424 = vsel %vm1256, %v1030, 0.0
    %v1425 = vadd.f32 %v1423, %v1424
    %v1426 = vsel %vm1256, %v1035, 0.0
    %v1427 = vadd.f32 %v1425, %v1426
    %v1428 = vsel %vm1256, %v1040, 0.0
    %v1429 = vadd.f32 %v1427, %v1428
    %v1430 = vsel %vm1256, %v1045, 0.0
    %v1431 = vadd.f32 %v1429, %v1430
    %v1432 = vsel %vm1256, %v1050, 0.0
    %v1433 = vadd.f32 %v1431, %v1432
    %v1434 = vsel %vm1256, %v1055, 0.0
    %v1435 = vadd.f32 %v1433, %v1434
    %v1436 = vsel %vm1256, %v1060, 0.0
    %v1437 = vadd.f32 %v1435, %v1436
    %v1438 = vsel %vm1256, %v1065, 0.0
    %v1439 = vadd.f32 %v1437, %v1438
    %v1440 = vsel %vm1256, %v1070, 0.0
    %v1441 = vadd.f32 %v1439, %v1440
    %v1442 = vsel %vm1256, %v1075, 0.0
    %v1443 = vadd.f32 %v1441, %v1442
    %v1444 = vsel %vm1256, %v1080, 0.0
    %v1445 = vadd.f32 %v1443, %v1444
    %v1446 = vsel %vm1256, %v1085, 0.0
    %v1447 = vadd.f32 %v1445, %v1446
    %v1448 = vsel %vm1256, %v1090, 0.0
    %v1449 = vadd.f32 %v1447, %v1448
    %v1450 = vsel %vm1256, %v1095, 0.0
    %v1451 = vadd.f32 %v1449, %v1450
    %v1452 = vsel %vm1256, %v1100, 0.0
    %v1453 = vadd.f32 %v1451, %v1452
    %v1454 = vsel %vm1256, %v1105, 0.0
    %v1455 = vadd.f32 %v1453, %v1454
    %v1456 = vsel %vm1256, %v1110, 0.0
    %v1457 = vadd.f32 %v1455, %v1456
    %v1458 = vsel %vm1256, %v1115, 0.0
    %v1459 = vadd.f32 %v1457, %v1458
    %v1460 = vsel %vm1256, %v1120, 0.0
    %v1461 = vadd.f32 %v1459, %v1460
    %v1462 = vsel %vm1256, %v1125, 0.0
    %v1463 = vadd.f32 %v1461, %v1462
    %v1464 = vsel %vm1256, %v1130, 0.0
    %v1465 = vadd.f32 %v1463, %v1464
    %v1466 = vsel %vm1256, %v1135, 0.0
    %v1467 = vadd.f32 %v1465, %v1466
    %v1468 = vsel %vm1256, %v1140, 0.0
    %v1469 = vadd.f32 %v1467, %v1468
    %v1470 = vsel %vm1256, %v1145, 0.0
    %v1471 = vadd.f32 %v1469, %v1470
    %v1472 = vsel %vm1256, %v1150, 0.0
    %v1473 = vadd.f32 %v1471, %v1472
    %v1474 = vsel %vm1256, %v1155, 0.0
    %v1475 = vadd.f32 %v1473, %v1474
    %v1476 = vsel %vm1256, %v1160, 0.0
    %v1477 = vadd.f32 %v1475, %v1476
    %v1478 = vsel %vm1256, %v1165, 0.0
    %v1479 = vadd.f32 %v1477, %v1478
    %v1480 = vsel %vm1256, %v1170, 0.0
    %v1481 = vadd.f32 %v1479, %v1480
    %v1482 = vsel %vm1256, %v1175, 0.0
    %v1483 = vadd.f32 %v1481, %v1482
    %v1484 = vsel %vm1256, %v1180, 0.0
    %v1485 = vadd.f32 %v1483, %v1484
    %v1486 = vsel %vm1256, %v1185, 0.0
    %v1487 = vadd.f32 %v1485, %v1486
    %v1488 = vsel %vm1256, %v1190, 0.0
    %v1489 = vadd.f32 %v1487, %v1488
    %v1490 = vsel %vm1256, %v1195, 0.0
    %v1491 = vadd.f32 %v1489, %v1490
    %v1492 = vsel %vm1256, %v1200, 0.0
    %v1493 = vadd.f32 %v1491, %v1492
    %v1494 = vsel %vm1256, %v1205, 0.0
    %v1495 = vadd.f32 %v1493, %v1494
    %v1496 = vsel %vm1256, %v1210, 0.0
    %v1497 = vadd.f32 %v1495, %v1496
    %v1498 = vsel %vm1256, %v1215, 0.0
    %v1499 = vadd.f32 %v1497, %v1498
    %v1500 = vsel %vm1256, %v1220, 0.0
    %v1501 = vadd.f32 %v1499, %v1500
    %v1502 = vsel %vm1256, %v1225, 0.0
    %v1503 = vadd.f32 %v1501, %v1502
    %v1504 = vsel %vm1256, %v1230, 0.0
    %v1505 = vadd.f32 %v1503, %v1504
    %v1506 = vsel %vm1256, %v1235, 0.0
    %v1507 = vadd.f32 %v1505, %v1506
    %v1508 = vsel %vm1256, %v1240, 0.0
    %v1509 = vadd.f32 %v1507, %v1508
    %v1510 = vsel %vm1256, %v1245, 0.0
    %v1511 = vadd.f32 %v1509, %v1510
    %v1512 = vrot.slane %v1511, 4
    %v1513 = vadd.f32 %v1511, %v1512
    %v1514 = vrot.slane %v1513, 2
    %v1515 = vadd.f32 %v1513, %v1514
    %v1516 = vrot.slane %v1515, 1
    %v1517 = vadd.f32 %v1515, %v1516
    %v1518 = vadd.f32 %v1255, %v1517
    %vm1519 = vcmask 57344
    %1520 = vst.msk [vmem:[#allocation2] sm:$0x1] %vm1519, %v1518
    %v1521 = vld [vmem:[#allocation4] sm:$0x1]
    %v1522 = vmul.f32 %v610, %v610
    %v1523 = vmul.f32 %v615, %v615
    %v1524 = vmul.f32 %v620, %v620
    %v1525 = vmul.f32 %v625, %v625
    %v1526 = vmul.f32 %v630, %v630
    %v1527 = vmul.f32 %v635, %v635
    %v1528 = vmul.f32 %v640, %v640
    %v1529 = vmul.f32 %v645, %v645
    %v1530 = vmul.f32 %v650, %v650
    %v1531 = vmul.f32 %v655, %v655
    %v1532 = vmul.f32 %v660, %v660
    %v1533 = vmul.f32 %v665, %v665
    %v1534 = vmul.f32 %v670, %v670
    %v1535 = vmul.f32 %v675, %v675
    %v1536 = vmul.f32 %v680, %v680
    %v1537 = vmul.f32 %v685, %v685
    %v1538 = vmul.f32 %v690, %v690
    %v1539 = vmul.f32 %v695, %v695
    %v1540 = vmul.f32 %v700, %v700
    %v1541 = vmul.f32 %v705, %v705
    %v1542 = vmul.f32 %v710, %v710
    %v1543 = vmul.f32 %v715, %v715
    %v1544 = vmul.f32 %v720, %v720
    %v1545 = vmul.f32 %v725, %v725
    %v1546 = vmul.f32 %v730, %v730
    %v1547 = vmul.f32 %v735, %v735
    %v1548 = vmul.f32 %v740, %v740
    %v1549 = vmul.f32 %v745, %v745
    %v1550 = vmul.f32 %v750, %v750
    %v1551 = vmul.f32 %v755, %v755
    %v1552 = vmul.f32 %v760, %v760
    %v1553 = vmul.f32 %v765, %v765
    %v1554 = vmul.f32 %v770, %v770
    %v1555 = vmul.f32 %v775, %v775
    %v1556 = vmul.f32 %v780, %v780
    %v1557 = vmul.f32 %v785, %v785
    %v1558 = vmul.f32 %v790, %v790
    %v1559 = vmul.f32 %v795, %v795
    %v1560 = vmul.f32 %v800, %v800
    %v1561 = vmul.f32 %v805, %v805
    %v1562 = vmul.f32 %v810, %v810
    %v1563 = vmul.f32 %v815, %v815
    %v1564 = vmul.f32 %v820, %v820
    %v1565 = vmul.f32 %v825, %v825
    %v1566 = vmul.f32 %v830, %v830
    %v1567 = vmul.f32 %v835, %v835
    %v1568 = vmul.f32 %v840, %v840
    %v1569 = vmul.f32 %v845, %v845
    %v1570 = vmul.f32 %v850, %v850
    %v1571 = vmul.f32 %v855, %v855
    %v1572 = vmul.f32 %v860, %v860
    %v1573 = vmul.f32 %v865, %v865
    %v1574 = vmul.f32 %v870, %v870
    %v1575 = vmul.f32 %v875, %v875
    %v1576 = vmul.f32 %v880, %v880
    %v1577 = vmul.f32 %v885, %v885
    %v1578 = vmul.f32 %v890, %v890
    %v1579 = vmul.f32 %v895, %v895
    %v1580 = vmul.f32 %v900, %v900
    %v1581 = vmul.f32 %v905, %v905
    %v1582 = vmul.f32 %v910, %v910
    %v1583 = vmul.f32 %v915, %v915
    %v1584 = vmul.f32 %v920, %v920
    %v1585 = vmul.f32 %v925, %v925
    %v1586 = vmul.f32 %v930, %v930
    %v1587 = vmul.f32 %v935, %v935
    %v1588 = vmul.f32 %v940, %v940
    %v1589 = vmul.f32 %v945, %v945
    %v1590 = vmul.f32 %v950, %v950
    %v1591 = vmul.f32 %v955, %v955
    %v1592 = vmul.f32 %v960, %v960
    %v1593 = vmul.f32 %v965, %v965
    %v1594 = vmul.f32 %v970, %v970
    %v1595 = vmul.f32 %v975, %v975
    %v1596 = vmul.f32 %v980, %v980
    %v1597 = vmul.f32 %v985, %v985
    %v1598 = vmul.f32 %v990, %v990
    %v1599 = vmul.f32 %v995, %v995
    %v1600 = vmul.f32 %v1000, %v1000
    %v1601 = vmul.f32 %v1005, %v1005
    %v1602 = vmul.f32 %v1010, %v1010
    %v1603 = vmul.f32 %v1015, %v1015
    %v1604 = vmul.f32 %v1020, %v1020
    %v1605 = vmul.f32 %v1025, %v1025
    %v1606 = vmul.f32 %v1030, %v1030
    %v1607 = vmul.f32 %v1035, %v1035
    %v1608 = vmul.f32 %v1040, %v1040
    %v1609 = vmul.f32 %v1045, %v1045
    %v1610 = vmul.f32 %v1050, %v1050
    %v1611 = vmul.f32 %v1055, %v1055
    %v1612 = vmul.f32 %v1060, %v1060
    %v1613 = vmul.f32 %v1065, %v1065
    %v1614 = vmul.f32 %v1070, %v1070
    %v1615 = vmul.f32 %v1075, %v1075
    %v1616 = vmul.f32 %v1080, %v1080
    %v1617 = vmul.f32 %v1085, %v1085
    %v1618 = vmul.f32 %v1090, %v1090
    %v1619 = vmul.f32 %v1095, %v1095
    %v1620 = vmul.f32 %v1100, %v1100
    %v1621 = vmul.f32 %v1105, %v1105
    %v1622 = vmul.f32 %v1110, %v1110
    %v1623 = vmul.f32 %v1115, %v1115
    %v1624 = vmul.f32 %v1120, %v1120
    %v1625 = vmul.f32 %v1125, %v1125
    %v1626 = vmul.f32 %v1130, %v1130
    %v1627 = vmul.f32 %v1135, %v1135
    %v1628 = vmul.f32 %v1140, %v1140
    %v1629 = vmul.f32 %v1145, %v1145
    %v1630 = vmul.f32 %v1150, %v1150
    %v1631 = vmul.f32 %v1155, %v1155
    %v1632 = vmul.f32 %v1160, %v1160
    %v1633 = vmul.f32 %v1165, %v1165
    %v1634 = vmul.f32 %v1170, %v1170
    %v1635 = vmul.f32 %v1175, %v1175
    %v1636 = vmul.f32 %v1180, %v1180
    %v1637 = vmul.f32 %v1185, %v1185
    %v1638 = vmul.f32 %v1190, %v1190
    %v1639 = vmul.f32 %v1195, %v1195
    %v1640 = vmul.f32 %v1200, %v1200
    %v1641 = vmul.f32 %v1205, %v1205
    %v1642 = vmul.f32 %v1210, %v1210
    %v1643 = vmul.f32 %v1215, %v1215
    %v1644 = vmul.f32 %v1220, %v1220
    %v1645 = vmul.f32 %v1225, %v1225
    %v1646 = vmul.f32 %v1230, %v1230
    %v1647 = vmul.f32 %v1235, %v1235
    %v1648 = vmul.f32 %v1240, %v1240
    %v1649 = vmul.f32 %v1245, %v1245
    %v1650 = vsel %vm1256, %v1522, 0.0
    %v1651 = vsel %vm1256, %v1523, 0.0
    %v1652 = vadd.f32 %v1650, %v1651
    %v1653 = vsel %vm1256, %v1524, 0.0
    %v1654 = vadd.f32 %v1652, %v1653
    %v1655 = vsel %vm1256, %v1525, 0.0
    %v1656 = vadd.f32 %v1654, %v1655
    %v1657 = vsel %vm1256, %v1526, 0.0
    %v1658 = vadd.f32 %v1656, %v1657
    %v1659 = vsel %vm1256, %v1527, 0.0
    %v1660 = vadd.f32 %v1658, %v1659
    %v1661 = vsel %vm1256, %v1528, 0.0
    %v1662 = vadd.f32 %v1660, %v1661
    %v1663 = vsel %vm1256, %v1529, 0.0
    %v1664 = vadd.f32 %v1662, %v1663
    %v1665 = vsel %vm1256, %v1530, 0.0
    %v1666 = vadd.f32 %v1664, %v1665
    %v1667 = vsel %vm1256, %v1531, 0.0
    %v1668 = vadd.f32 %v1666, %v1667
    %v1669 = vsel %vm1256, %v1532, 0.0
    %v1670 = vadd.f32 %v1668, %v1669
    %v1671 = vsel %vm1256, %v1533, 0.0
    %v1672 = vadd.f32 %v1670, %v1671
    %v1673 = vsel %vm1256, %v1534, 0.0
    %v1674 = vadd.f32 %v1672, %v1673
    %v1675 = vsel %vm1256, %v1535, 0.0
    %v1676 = vadd.f32 %v1674, %v1675
    %v1677 = vsel %vm1256, %v1536, 0.0
    %v1678 = vadd.f32 %v1676, %v1677
    %v1679 = vsel %vm1256, %v1537, 0.0
    %v1680 = vadd.f32 %v1678, %v1679
    %v1681 = vsel %vm1256, %v1538, 0.0
    %v1682 = vadd.f32 %v1680, %v1681
    %v1683 = vsel %vm1256, %v1539, 0.0
    %v1684 = vadd.f32 %v1682, %v1683
    %v1685 = vsel %vm1256, %v1540, 0.0
    %v1686 = vadd.f32 %v1684, %v1685
    %v1687 = vsel %vm1256, %v1541, 0.0
    %v1688 = vadd.f32 %v1686, %v1687
    %v1689 = vsel %vm1256, %v1542, 0.0
    %v1690 = vadd.f32 %v1688, %v1689
    %v1691 = vsel %vm1256, %v1543, 0.0
    %v1692 = vadd.f32 %v1690, %v1691
    %v1693 = vsel %vm1256, %v1544, 0.0
    %v1694 = vadd.f32 %v1692, %v1693
    %v1695 = vsel %vm1256, %v1545, 0.0
    %v1696 = vadd.f32 %v1694, %v1695
    %v1697 = vsel %vm1256, %v1546, 0.0
    %v1698 = vadd.f32 %v1696, %v1697
    %v1699 = vsel %vm1256, %v1547, 0.0
    %v1700 = vadd.f32 %v1698, %v1699
    %v1701 = vsel %vm1256, %v1548, 0.0
    %v1702 = vadd.f32 %v1700, %v1701
    %v1703 = vsel %vm1256, %v1549, 0.0
    %v1704 = vadd.f32 %v1702, %v1703
    %v1705 = vsel %vm1256, %v1550, 0.0
    %v1706 = vadd.f32 %v1704, %v1705
    %v1707 = vsel %vm1256, %v1551, 0.0
    %v1708 = vadd.f32 %v1706, %v1707
    %v1709 = vsel %vm1256, %v1552, 0.0
    %v1710 = vadd.f32 %v1708, %v1709
    %v1711 = vsel %vm1256, %v1553, 0.0
    %v1712 = vadd.f32 %v1710, %v1711
    %v1713 = vsel %vm1256, %v1554, 0.0
    %v1714 = vadd.f32 %v1712, %v1713
    %v1715 = vsel %vm1256, %v1555, 0.0
    %v1716 = vadd.f32 %v1714, %v1715
    %v1717 = vsel %vm1256, %v1556, 0.0
    %v1718 = vadd.f32 %v1716, %v1717
    %v1719 = vsel %vm1256, %v1557, 0.0
    %v1720 = vadd.f32 %v1718, %v1719
    %v1721 = vsel %vm1256, %v1558, 0.0
    %v1722 = vadd.f32 %v1720, %v1721
    %v1723 = vsel %vm1256, %v1559, 0.0
    %v1724 = vadd.f32 %v1722, %v1723
    %v1725 = vsel %vm1256, %v1560, 0.0
    %v1726 = vadd.f32 %v1724, %v1725
    %v1727 = vsel %vm1256, %v1561, 0.0
    %v1728 = vadd.f32 %v1726, %v1727
    %v1729 = vsel %vm1256, %v1562, 0.0
    %v1730 = vadd.f32 %v1728, %v1729
    %v1731 = vsel %vm1256, %v1563, 0.0
    %v1732 = vadd.f32 %v1730, %v1731
    %v1733 = vsel %vm1256, %v1564, 0.0
    %v1734 = vadd.f32 %v1732, %v1733
    %v1735 = vsel %vm1256, %v1565, 0.0
    %v1736 = vadd.f32 %v1734, %v1735
    %v1737 = vsel %vm1256, %v1566, 0.0
    %v1738 = vadd.f32 %v1736, %v1737
    %v1739 = vsel %vm1256, %v1567, 0.0
    %v1740 = vadd.f32 %v1738, %v1739
    %v1741 = vsel %vm1256, %v1568, 0.0
    %v1742 = vadd.f32 %v1740, %v1741
    %v1743 = vsel %vm1256, %v1569, 0.0
    %v1744 = vadd.f32 %v1742, %v1743
    %v1745 = vsel %vm1256, %v1570, 0.0
    %v1746 = vadd.f32 %v1744, %v1745
    %v1747 = vsel %vm1256, %v1571, 0.0
    %v1748 = vadd.f32 %v1746, %v1747
    %v1749 = vsel %vm1256, %v1572, 0.0
    %v1750 = vadd.f32 %v1748, %v1749
    %v1751 = vsel %vm1256, %v1573, 0.0
    %v1752 = vadd.f32 %v1750, %v1751
    %v1753 = vsel %vm1256, %v1574, 0.0
    %v1754 = vadd.f32 %v1752, %v1753
    %v1755 = vsel %vm1256, %v1575, 0.0
    %v1756 = vadd.f32 %v1754, %v1755
    %v1757 = vsel %vm1256, %v1576, 0.0
    %v1758 = vadd.f32 %v1756, %v1757
    %v1759 = vsel %vm1256, %v1577, 0.0
    %v1760 = vadd.f32 %v1758, %v1759
    %v1761 = vsel %vm1256, %v1578, 0.0
    %v1762 = vadd.f32 %v1760, %v1761
    %v1763 = vsel %vm1256, %v1579, 0.0
    %v1764 = vadd.f32 %v1762, %v1763
    %v1765 = vsel %vm1256, %v1580, 0.0
    %v1766 = vadd.f32 %v1764, %v1765
    %v1767 = vsel %vm1256, %v1581, 0.0
    %v1768 = vadd.f32 %v1766, %v1767
    %v1769 = vsel %vm1256, %v1582, 0.0
    %v1770 = vadd.f32 %v1768, %v1769
    %v1771 = vsel %vm1256, %v1583, 0.0
    %v1772 = vadd.f32 %v1770, %v1771
    %v1773 = vsel %vm1256, %v1584, 0.0
    %v1774 = vadd.f32 %v1772, %v1773
    %v1775 = vsel %vm1256, %v1585, 0.0
    %v1776 = vadd.f32 %v1774, %v1775
    %v1777 = vsel %vm1256, %v1586, 0.0
    %v1778 = vadd.f32 %v1776, %v1777
    %v1779 = vsel %vm1256, %v1587, 0.0
    %v1780 = vadd.f32 %v1778, %v1779
    %v1781 = vsel %vm1256, %v1588, 0.0
    %v1782 = vadd.f32 %v1780, %v1781
    %v1783 = vsel %vm1256, %v1589, 0.0
    %v1784 = vadd.f32 %v1782, %v1783
    %v1785 = vsel %vm1256, %v1590, 0.0
    %v1786 = vadd.f32 %v1784, %v1785
    %v1787 = vsel %vm1256, %v1591, 0.0
    %v1788 = vadd.f32 %v1786, %v1787
    %v1789 = vsel %vm1256, %v1592, 0.0
    %v1790 = vadd.f32 %v1788, %v1789
    %v1791 = vsel %vm1256, %v1593, 0.0
    %v1792 = vadd.f32 %v1790, %v1791
    %v1793 = vsel %vm1256, %v1594, 0.0
    %v1794 = vadd.f32 %v1792, %v1793
    %v1795 = vsel %vm1256, %v1595, 0.0
    %v1796 = vadd.f32 %v1794, %v1795
    %v1797 = vsel %vm1256, %v1596, 0.0
    %v1798 = vadd.f32 %v1796, %v1797
    %v1799 = vsel %vm1256, %v1597, 0.0
    %v1800 = vadd.f32 %v1798, %v1799
    %v1801 = vsel %vm1256, %v1598, 0.0
    %v1802 = vadd.f32 %v1800, %v1801
    %v1803 = vsel %vm1256, %v1599, 0.0
    %v1804 = vadd.f32 %v1802, %v1803
    %v1805 = vsel %vm1256, %v1600, 0.0
    %v1806 = vadd.f32 %v1804, %v1805
    %v1807 = vsel %vm1256, %v1601, 0.0
    %v1808 = vadd.f32 %v1806, %v1807
    %v1809 = vsel %vm1256, %v1602, 0.0
    %v1810 = vadd.f32 %v1808, %v1809
    %v1811 = vsel %vm1256, %v1603, 0.0
    %v1812 = vadd.f32 %v1810, %v1811
    %v1813 = vsel %vm1256, %v1604, 0.0
    %v1814 = vadd.f32 %v1812, %v1813
    %v1815 = vsel %vm1256, %v1605, 0.0
    %v1816 = vadd.f32 %v1814, %v1815
    %v1817 = vsel %vm1256, %v1606, 0.0
    %v1818 = vadd.f32 %v1816, %v1817
    %v1819 = vsel %vm1256, %v1607, 0.0
    %v1820 = vadd.f32 %v1818, %v1819
    %v1821 = vsel %vm1256, %v1608, 0.0
    %v1822 = vadd.f32 %v1820, %v1821
    %v1823 = vsel %vm1256, %v1609, 0.0
    %v1824 = vadd.f32 %v1822, %v1823
    %v1825 = vsel %vm1256, %v1610, 0.0
    %v1826 = vadd.f32 %v1824, %v1825
    %v1827 = vsel %vm1256, %v1611, 0.0
    %v1828 = vadd.f32 %v1826, %v1827
    %v1829 = vsel %vm1256, %v1612, 0.0
    %v1830 = vadd.f32 %v1828, %v1829
    %v1831 = vsel %vm1256, %v1613, 0.0
    %v1832 = vadd.f32 %v1830, %v1831
    %v1833 = vsel %vm1256, %v1614, 0.0
    %v1834 = vadd.f32 %v1832, %v1833
    %v1835 = vsel %vm1256, %v1615, 0.0
    %v1836 = vadd.f32 %v1834, %v1835
    %v1837 = vsel %vm1256, %v1616, 0.0
    %v1838 = vadd.f32 %v1836, %v1837
    %v1839 = vsel %vm1256, %v1617, 0.0
    %v1840 = vadd.f32 %v1838, %v1839
    %v1841 = vsel %vm1256, %v1618, 0.0
    %v1842 = vadd.f32 %v1840, %v1841
    %v1843 = vsel %vm1256, %v1619, 0.0
    %v1844 = vadd.f32 %v1842, %v1843
    %v1845 = vsel %vm1256, %v1620, 0.0
    %v1846 = vadd.f32 %v1844, %v1845
    %v1847 = vsel %vm1256, %v1621, 0.0
    %v1848 = vadd.f32 %v1846, %v1847
    %v1849 = vsel %vm1256, %v1622, 0.0
    %v1850 = vadd.f32 %v1848, %v1849
    %v1851 = vsel %vm1256, %v1623, 0.0
    %v1852 = vadd.f32 %v1850, %v1851
    %v1853 = vsel %vm1256, %v1624, 0.0
    %v1854 = vadd.f32 %v1852, %v1853
    %v1855 = vsel %vm1256, %v1625, 0.0
    %v1856 = vadd.f32 %v1854, %v1855
    %v1857 = vsel %vm1256, %v1626, 0.0
    %v1858 = vadd.f32 %v1856, %v1857
    %v1859 = vsel %vm1256, %v1627, 0.0
    %v1860 = vadd.f32 %v1858, %v1859
    %v1861 = vsel %vm1256, %v1628, 0.0
    %v1862 = vadd.f32 %v1860, %v1861
    %v1863 = vsel %vm1256, %v1629, 0.0
    %v1864 = vadd.f32 %v1862, %v1863
    %v1865 = vsel %vm1256, %v1630, 0.0
    %v1866 = vadd.f32 %v1864, %v1865
    %v1867 = vsel %vm1256, %v1631, 0.0
    %v1868 = vadd.f32 %v1866, %v1867
    %v1869 = vsel %vm1256, %v1632, 0.0
    %v1870 = vadd.f32 %v1868, %v1869
    %v1871 = vsel %vm1256, %v1633, 0.0
    %v1872 = vadd.f32 %v1870, %v1871
    %v1873 = vsel %vm1256, %v1634, 0.0
    %v1874 = vadd.f32 %v1872, %v1873
    %v1875 = vsel %vm1256, %v1635, 0.0
    %v1876 = vadd.f32 %v1874, %v1875
    %v1877 = vsel %vm1256, %v1636, 0.0
    %v1878 = vadd.f32 %v1876, %v1877
    %v1879 = vsel %vm1256, %v1637, 0.0
    %v1880 = vadd.f32 %v1878, %v1879
    %v1881 = vsel %vm1256, %v1638, 0.0
    %v1882 = vadd.f32 %v1880, %v1881
    %v1883 = vsel %vm1256, %v1639, 0.0
    %v1884 = vadd.f32 %v1882, %v1883
    %v1885 = vsel %vm1256, %v1640, 0.0
    %v1886 = vadd.f32 %v1884, %v1885
    %v1887 = vsel %vm1256, %v1641, 0.0
    %v1888 = vadd.f32 %v1886, %v1887
    %v1889 = vsel %vm1256, %v1642, 0.0
    %v1890 = vadd.f32 %v1888, %v1889
    %v1891 = vsel %vm1256, %v1643, 0.0
    %v1892 = vadd.f32 %v1890, %v1891
    %v1893 = vsel %vm1256, %v1644, 0.0
    %v1894 = vadd.f32 %v1892, %v1893
    %v1895 = vsel %vm1256, %v1645, 0.0
    %v1896 = vadd.f32 %v1894, %v1895
    %v1897 = vsel %vm1256, %v1646, 0.0
    %v1898 = vadd.f32 %v1896, %v1897
    %v1899 = vsel %vm1256, %v1647, 0.0
    %v1900 = vadd.f32 %v1898, %v1899
    %v1901 = vsel %vm1256, %v1648, 0.0
    %v1902 = vadd.f32 %v1900, %v1901
    %v1903 = vsel %vm1256, %v1649, 0.0
    %v1904 = vadd.f32 %v1902, %v1903
    %v1905 = vrot.slane %v1904, 4
    %v1906 = vadd.f32 %v1904, %v1905
    %v1907 = vrot.slane %v1906, 2
    %v1908 = vadd.f32 %v1906, %v1907
    %v1909 = vrot.slane %v1908, 1
    %v1910 = vadd.f32 %v1908, %v1909
    %v1911 = vadd.f32 %v1521, %v1910
    %1912 = vst.msk [vmem:[#allocation4] sm:$0x1] %vm1519, %v1911
    // Predicated region
    $region18: #{tpu_custom_call.1} parent=1 // pred_check
      _
    $region19: #{tpu_custom_call.1} parent=1 // pred_check_branch
      %1914 = sbr.rel (0) target = $region21
    $region20: #{tpu_custom_call.1} parent=1 // pred_region
      %s1916 = ssub.s32 16, 16
      %1917 = vsyncadd [#allocation3], %s1916
      %s1919 = sshll.u32 [#allocation2], 4
      %s1920 = int_to_ptr.vmem [resolvable:$true] %s1919
      %1922 = dma.vmem_to_hbm [thread:$0]  %s1920, 16, %s3, [#allocation3]
    $region21: #{tpu_custom_call.1} parent=1 // pred_fallthru
      _
    // Predicated region
    $region22: #{tpu_custom_call.1} parent=1 // pred_check
      _
    $region23: #{tpu_custom_call.1} parent=1 // pred_check_branch
      %1924 = sbr.rel (0) target = $region25
    $region24: #{tpu_custom_call.1} parent=1 // pred_region
      %s1926 = ssub.s32 16, 16
      %1927 = vsyncadd [#allocation5], %s1926
      %s1929 = sshll.u32 [#allocation4], 4
      %s1930 = int_to_ptr.vmem [resolvable:$true] %s1929
      %1932 = dma.vmem_to_hbm [thread:$0]  %s1930, 16, %s4, [#allocation5]
    $region25: #{tpu_custom_call.1} parent=1 // pred_fallthru
      _
    // Predicated region
    $region26: #{tpu_custom_call.1} parent=1 // pred_check
      _
    $region27: #{tpu_custom_call.1} parent=1 // pred_check_branch
      %1934 = sbr.rel (0) target = $region29
    $region28: #{tpu_custom_call.1} parent=1 // pred_region
      %1935 = dma.done [#allocation3], 16
    $region29: #{tpu_custom_call.1} parent=1 // pred_fallthru
      _
    // Predicated region
    $region30: #{tpu_custom_call.1} parent=1 // pred_check
      _
    $region31: #{tpu_custom_call.1} parent=1 // pred_check_branch
      %1937 = sbr.rel (0) target = $region33
    $region32: #{tpu_custom_call.1} parent=1 // pred_region
      %1938 = dma.done [#allocation5], 16
    $region33: #{tpu_custom_call.1} parent=1 // pred_fallthru
      _
    %1939 = vsyncpa [#allocation3], 1
    %1940 = vsyncpa [#allocation5], 1

</llo_original>
